<compile_context>
chip_gen: v7x
topology: tpu7x:2x2x1
jax: 0.10.0
libtpu: 0.0.40
codegen_flags: <defaults>
</compile_context>

<pallas_src>
import functools

import numpy as np

import jax
import jax.numpy as jnp
from jax.experimental import pallas as pl
from jax.experimental.pallas import tpu as pltpu


# ----------------------------------------------------------------------------- constants

def _round_up(v, m):
    return (v + m - 1) // m * m


def _hann_window(win):
    n = np.arange(win)
    return (0.5 - 0.5 * np.cos(2.0 * np.pi * n / win)).astype(np.float64)


def _hz_to_mel(freqs):  # slaney scale (librosa default)
    freqs = np.asarray(freqs, dtype=np.float64)
    f_sp = 200.0 / 3
    mels = freqs / f_sp
    min_log_hz = 1000.0
    min_log_mel = min_log_hz / f_sp
    logstep = np.log(6.4) / 27.0
    return np.where(freqs >= min_log_hz,
                    min_log_mel + np.log(np.maximum(freqs, 1e-12) / min_log_hz) / logstep,
                    mels)


def _mel_to_hz(mels):
    mels = np.asarray(mels, dtype=np.float64)
    f_sp = 200.0 / 3
    freqs = mels * f_sp
    min_log_hz = 1000.0
    min_log_mel = min_log_hz / f_sp
    logstep = np.log(6.4) / 27.0
    return np.where(mels >= min_log_mel,
                    min_log_hz * np.exp(logstep * (mels - min_log_mel)), freqs)


def _mel_filterbank(sr, n_fft, n_mels, fmin, fmax):
    """librosa-style slaney mel filterbank, shape (n_mels, n_fft//2 + 1)."""
    if fmax is None:
        fmax = sr / 2.0
    n_freq = n_fft // 2 + 1
    fft_freqs = np.linspace(0.0, sr / 2.0, n_freq)
    mel_pts = np.linspace(_hz_to_mel(fmin), _hz_to_mel(fmax), n_mels + 2)
    hz_pts = _mel_to_hz(mel_pts)
    fdiff = np.diff(hz_pts)
    ramps = hz_pts[:, None] - fft_freqs[None, :]
    lower = -ramps[:-2] / fdiff[:-1, None]
    upper = ramps[2:] / fdiff[1:, None]
    weights = np.maximum(0.0, np.minimum(lower, upper))
    enorm = 2.0 / (hz_pts[2:n_mels + 2] - hz_pts[:n_mels])
    weights *= enorm[:, None]
    return weights.astype(np.float32)


def _build_scale_constants(sr, win, n_mels, fmin, fmax):
    """Windowed-DFT matrix (win, 2*Fp) = [hann*cos | -hann*sin] and padded mel basis (Fp, Mp)."""
    n_freq = win // 2 + 1
    fp = _round_up(n_freq, 128)
    mp = _round_up(n_mels, 128)
    window = _hann_window(win)
    n = np.arange(win, dtype=np.float64)[:, None]
    k = np.arange(n_freq, dtype=np.float64)[None, :]
    ang = 2.0 * np.pi * n * k / win
    w = np.zeros((win, 2 * fp), np.float32)
    w[:, :n_freq] = (window[:, None] * np.cos(ang)).astype(np.float32)
    w[:, fp:fp + n_freq] = (window[:, None] * -np.sin(ang)).astype(np.float32)
    fb = _mel_filterbank(sr, win, n_mels, fmin, fmax)      # (n_mels, n_freq)
    mel = np.zeros((fp, mp), np.float32)
    mel[:n_freq, :n_mels] = fb.T
    return jnp.asarray(w), jnp.asarray(mel)


def _frame_signal(sig, win, hop):
    """(B, C, L) -> ((B*C*n_frames, win), n_frames).  Matches audiotools: right-pad (reflect)
    to a hop multiple, then torch.stft center=True reflect padding of win//2."""
    B, C, L = sig.shape
    right = (-L) % hop
    if right:
        sig = jnp.pad(sig, ((0, 0), (0, 0), (0, right)), mode="reflect")
    Lp = L + right
    half = win // 2
    sig = jnp.pad(sig, ((0, 0), (0, 0), (half, half)), mode="reflect")
    n_frames = Lp // hop + 1
    idx = (np.arange(n_frames) * hop)[:, None] + np.arange(win)[None, :]
    frames = sig[:, :, idx]                                  # (B, C, n_frames, win)
    return frames.reshape(B * C * n_frames, win).astype(jnp.float32), n_frames


# ----------------------------------------------------------------------------- kernel

def _mel_loss_block_kernel(fx_ref, fy_ref, w_ref, mel_ref, dlog_ref, dmag_ref, *,
                           half, clamp_eps, power):
    tf = fx_ref.shape[0]

    # One DFT matmul for x- and y-frames together (2*TF rows on the MXU).
    f = jnp.concatenate([fx_ref[...], fy_ref[...]], axis=0)          # (2*TF, win)
    z = jnp.dot(f, w_ref[...], preferred_element_type=jnp.float32)   # (2*TF, 2*Fp)
    re = z[:, :half]
    im = z[:, half:]
    mag = jnp.sqrt(re * re + im * im)                                 # (2*TF, Fp)

    mel = jnp.dot(mag, mel_ref[...], preferred_element_type=jnp.float32)  # (2*TF, Mp)
    mel_x = mel[:tf]
    mel_y = mel[tf:]

    # log10(clamp(m, eps)^pow) == (pow/ln10) * ln(clamp(m, eps))   (single EUP log)
    log_scale = power / np.log(10.0)
    log_x = log_scale * jnp.log(jnp.maximum(mel_x, clamp_eps))
    log_y = log_scale * jnp.log(jnp.maximum(mel_y, clamp_eps))

    dlog_ref[...] = jnp.abs(log_x - log_y)                            # (TF, Mp) lane-dense
    dmag_ref[...] = jnp.abs(mel_x - mel_y)


def _mel_abs_diffs(frames_x, frames_y, w_mat, mel_mat, *, clamp_eps, power, frame_tile):
    nf_pad, win = frames_x.shape
    fp2 = w_mat.shape[1]
    half = fp2 // 2
    mp = mel_mat.shape[1]
    n_blocks = nf_pad // frame_tile

    kernel = functools.partial(_mel_loss_block_kernel,
                               half=half, clamp_eps=clamp_eps, power=power)

    return pl.pallas_call(
        kernel,
        out_shape=(jax.ShapeDtypeStruct((nf_pad, mp), jnp.float32),
                   jax.ShapeDtypeStruct((nf_pad, mp), jnp.float32)),
        grid_spec=pltpu.PrefetchScalarGridSpec(
            num_scalar_prefetch=0,
            grid=(n_blocks,),
            in_specs=[
                pl.BlockSpec((frame_tile, win), lambda i: (i, 0)),    # x frames tile
                pl.BlockSpec((frame_tile, win), lambda i: (i, 0)),    # y frames tile
                pl.BlockSpec((win, fp2), lambda i: (0, 0)),           # windowed DFT matrix
                pl.BlockSpec((half, mp), lambda i: (0, 0)),           # padded mel basis
            ],
            out_specs=(
                pl.BlockSpec((frame_tile, mp), lambda i: (i, 0)),     # |log mel diff|
                pl.BlockSpec((frame_tile, mp), lambda i: (i, 0)),     # |mel diff|
            ),
        ),
        compiler_params=pltpu.CompilerParams(
            dimension_semantics=("parallel",),                        # frame blocks independent
        ),
    )(frames_x, frames_y, w_mat, mel_mat)


# ----------------------------------------------------------------------------- wrapper

def mel_spectrogram_loss_pallas(x, y, *, sample_rate,
                                n_mels=(150, 80), window_lengths=(2048, 512),
                                clamp_eps=1e-5, mag_weight=1.0, log_weight=1.0,
                                power=2.0, mel_fmin=(0.0, 0.0), mel_fmax=(None, None),
                                frame_tile=32):
    """x, y: (B, C, L) audio.  Returns the scalar multi-scale mel loss."""
    B, C, _ = x.shape
    loss = jnp.zeros((), jnp.float32)
    for nm, wl, fmin, fmax in zip(n_mels, window_lengths, mel_fmin, mel_fmax):
        hop = wl // 4
        w_mat, mel_mat = _build_scale_constants(sample_rate, wl, nm, fmin, fmax)

        fx, n_frames = _frame_signal(x, wl, hop)
        fy, _ = _frame_signal(y, wl, hop)

        nf = fx.shape[0]
        nf_pad = _round_up(nf, frame_tile)
        if nf_pad != nf:                       # zero frames -> zero diff, harmless
            fx = jnp.pad(fx, ((0, nf_pad - nf), (0, 0)))
            fy = jnp.pad(fy, ((0, nf_pad - nf), (0, 0)))

        dlog, dmag = _mel_abs_diffs(fx, fy, w_mat, mel_mat,
                                    clamp_eps=clamp_eps, power=power, frame_tile=frame_tile)

        denom = jnp.float32(B * C * n_frames * nm)        # true element count (padding = 0)
        loss = loss + log_weight * jnp.sum(dlog) / denom + mag_weight * jnp.sum(dmag) / denom
    return loss


# ----------------------------------------------------------------------------- reference

def mel_spectrogram_loss_reference(x, y, *, sample_rate,
                                   n_mels=(150, 80), window_lengths=(2048, 512),
                                   clamp_eps=1e-5, mag_weight=1.0, log_weight=1.0,
                                   power=2.0, mel_fmin=(0.0, 0.0), mel_fmax=(None, None)):
    """Pure-JAX reference (FFT-based), matching the PyTorch/audiotools semantics."""
    loss = jnp.zeros((), jnp.float32)
    for nm, wl, fmin, fmax in zip(n_mels, window_lengths, mel_fmin, mel_fmax):
        hop = wl // 4
        window = jnp.asarray(_hann_window(wl).astype(np.float32))
        fb = jnp.asarray(_mel_filterbank(sample_rate, wl, nm, fmin, fmax))   # (nm, n_freq)

        def mel_spec(sig):
            frames, _ = _frame_signal(sig, wl, hop)                          # (N, wl)
            spec = jnp.fft.rfft(frames * window[None, :], axis=-1)
            mag = jnp.abs(spec).astype(jnp.float32)                          # (N, n_freq)
            return jnp.matmul(mag, fb.T, precision=jax.lax.Precision.HIGHEST)

        mx, my = mel_spec(x), mel_spec(y)
        lx = jnp.log10(jnp.maximum(mx, clamp_eps) ** power)
        ly = jnp.log10(jnp.maximum(my, clamp_eps) ** power)
        loss = loss + log_weight * jnp.mean(jnp.abs(lx - ly)) + mag_weight * jnp.mean(jnp.abs(mx - my))
    return loss


# ----------------------------------------------------------------------------- test

if __name__ == "__main__":
    # Small shapes consistent with the module: (batch, channels, samples) audio, two STFT scales.
    B, C, L = 2, 1, 2048
    sample_rate = 16000
    n_mels = (80, 40)
    window_lengths = (512, 128)

    key = jax.random.PRNGKey(0)
    kx, ky = jax.random.split(key)
    x = jax.random.normal(kx, (B, C, L), jnp.float32)   # "estimate" signal
    y = jax.random.normal(ky, (B, C, L), jnp.float32)   # "reference" signal

    loss = mel_spectrogram_loss_pallas(x, y, sample_rate=sample_rate,
                                       n_mels=n_mels, window_lengths=window_lengths)
    loss = jax.block_until_ready(loss)

    ref = mel_spectrogram_loss_reference(x, y, sample_rate=sample_rate,
                                         n_mels=n_mels, window_lengths=window_lengths)
    ref = jax.block_until_ready(ref)

    rel_err = abs(float(loss) - float(ref)) / max(abs(float(ref)), 1e-6)
    assert rel_err < 2e-2, f"loss={float(loss)} ref={float(ref)} rel_err={rel_err}"

    print("KERNEL_OK")
</pallas_src>

<mosaic_0001>
module attributes {stable_mosaic.version = 11 : i64} {
  func.func @_mel_loss_block_kernel(%arg0: i32, %arg1: memref<32x512xf32, #tpu.memory_space<vmem>>, %arg2: memref<32x512xf32, #tpu.memory_space<vmem>>, %arg3: memref<512x768xf32, #tpu.memory_space<vmem>>, %arg4: memref<384x128xf32, #tpu.memory_space<vmem>>, %arg5: memref<32x128xf32, #tpu.memory_space<vmem>>, %arg6: memref<32x128xf32, #tpu.memory_space<vmem>>) attributes {dimension_semantics = [#tpu.dimension_semantics<parallel>], iteration_bounds = array<i64: 2>, scalar_prefetch = 0 : i64, scratch_operands = 0 : i64, tpu.core_type = #tpu.core_type<tc>, window_params = [{transform_indices = @transform_0, window_bounds = array<i64: 32, 512>}, {transform_indices = @transform_1, window_bounds = array<i64: 32, 512>}, {pipeline_mode = #tpu.pipeline_mode<synchronous>, transform_indices = @transform_2, window_bounds = array<i64: 512, 768>}, {pipeline_mode = #tpu.pipeline_mode<synchronous>, transform_indices = @transform_3, window_bounds = array<i64: 384, 128>}, {transform_indices = @transform_4, window_bounds = array<i64: 32, 128>}, {transform_indices = @transform_5, window_bounds = array<i64: 32, 128>}]} {
    %c0 = arith.constant 0 : index
    %c0_0 = arith.constant 0 : index
    %0 = vector.load %arg1[%c0, %c0_0] : memref<32x512xf32, #tpu.memory_space<vmem>>, vector<32x512xf32>
    %c0_1 = arith.constant 0 : index
    %c0_2 = arith.constant 0 : index
    %1 = vector.load %arg2[%c0_1, %c0_2] : memref<32x512xf32, #tpu.memory_space<vmem>>, vector<32x512xf32>
    %2 = tpu.concatenate %0, %1 in 0 : vector<32x512xf32>, vector<32x512xf32> -> vector<64x512xf32>
    %c0_3 = arith.constant 0 : index
    %c0_4 = arith.constant 0 : index
    %3 = vector.load %arg3[%c0_3, %c0_4] : memref<512x768xf32, #tpu.memory_space<vmem>>, vector<512x768xf32>
    %cst = arith.constant dense<0.000000e+00> : vector<64x768xf32>
    %4 = tpu.matmul %2, %3, %cst {dimension_numbers = #tpu.dot_dimension_numbers<[1], [0], [0], [1], [0, 0, 1, 1], [], []>} : vector<64x512xf32>, vector<512x768xf32>, vector<64x768xf32> -> vector<64x768xf32>
    %5 = vector.extract_strided_slice %4 {offsets = [0, 0], sizes = [64, 384], strides = [1, 1]} : vector<64x768xf32> to vector<64x384xf32>
    %6 = vector.extract_strided_slice %4 {offsets = [0, 384], sizes = [64, 384], strides = [1, 1]} : vector<64x768xf32> to vector<64x384xf32>
    %7 = arith.mulf %5, %5 : vector<64x384xf32>
    %8 = arith.mulf %6, %6 : vector<64x384xf32>
    %9 = arith.addf %7, %8 : vector<64x384xf32>
    %10 = math.sqrt %9 : vector<64x384xf32>
    %c0_5 = arith.constant 0 : index
    %c0_6 = arith.constant 0 : index
    %11 = vector.load %arg4[%c0_5, %c0_6] : memref<384x128xf32, #tpu.memory_space<vmem>>, vector<384x128xf32>
    %cst_7 = arith.constant dense<0.000000e+00> : vector<64x128xf32>
    %12 = tpu.matmul %10, %11, %cst_7 {dimension_numbers = #tpu.dot_dimension_numbers<[1], [0], [0], [1], [0, 0, 1, 1], [], []>} : vector<64x384xf32>, vector<384x128xf32>, vector<64x128xf32> -> vector<64x128xf32>
    %13 = vector.extract_strided_slice %12 {offsets = [0, 0], sizes = [32, 128], strides = [1, 1]} : vector<64x128xf32> to vector<32x128xf32>
    %14 = vector.extract_strided_slice %12 {offsets = [32, 0], sizes = [32, 128], strides = [1, 1]} : vector<64x128xf32> to vector<32x128xf32>
    %cst_8 = arith.constant 9.99999974E-6 : f32
    %15 = vector.broadcast %cst_8 : f32 to vector<32x128xf32>
    %16 = arith.maximumf %13, %15 : vector<32x128xf32>
    %17 = math.log %16 : vector<32x128xf32>
    %cst_9 = arith.constant 0.868588984 : f32
    %18 = vector.broadcast %cst_9 : f32 to vector<32x128xf32>
    %19 = arith.mulf %18, %17 : vector<32x128xf32>
    %cst_10 = arith.constant 9.99999974E-6 : f32
    %20 = vector.broadcast %cst_10 : f32 to vector<32x128xf32>
    %21 = arith.maximumf %14, %20 : vector<32x128xf32>
    %22 = math.log %21 : vector<32x128xf32>
    %cst_11 = arith.constant 0.868588984 : f32
    %23 = vector.broadcast %cst_11 : f32 to vector<32x128xf32>
    %24 = arith.mulf %23, %22 : vector<32x128xf32>
    %25 = arith.subf %19, %24 : vector<32x128xf32>
    %26 = math.absf %25 : vector<32x128xf32>
    %c0_12 = arith.constant 0 : index
    %c0_13 = arith.constant 0 : index
    %27 = vector.load %arg5[%c0_12, %c0_13] : memref<32x128xf32, #tpu.memory_space<vmem>>, vector<32x128xf32>
    tpu.vector_store %arg5[%c0_12, %c0_13], %26 {strides = array<i32>} : memref<32x128xf32, #tpu.memory_space<vmem>>, vector<32x128xf32>,
    %28 = arith.subf %13, %14 : vector<32x128xf32>
    %29 = math.absf %28 : vector<32x128xf32>
    %c0_14 = arith.constant 0 : index
    %c0_15 = arith.constant 0 : index
    %30 = vector.load %arg6[%c0_14, %c0_15] : memref<32x128xf32, #tpu.memory_space<vmem>>, vector<32x128xf32>
    tpu.vector_store %arg6[%c0_14, %c0_15], %29 {strides = array<i32>} : memref<32x128xf32, #tpu.memory_space<vmem>>, vector<32x128xf32>,
    return
  }
  func.func @transform_0(%arg0: i32) -> (i32, i32) {
    %c0_i32 = arith.constant 0 : i32
    %c0_i32_0 = arith.constant 0 : i32
    return %arg0, %c0_i32 : i32, i32
  }
  func.func @transform_1(%arg0: i32) -> (i32, i32) {
    %c0_i32 = arith.constant 0 : i32
    %c0_i32_0 = arith.constant 0 : i32
    return %arg0, %c0_i32 : i32, i32
  }
  func.func @transform_2(%arg0: i32) -> (i32, i32) {
    %c0_i32 = arith.constant 0 : i32
    %c0_i32_0 = arith.constant 0 : i32
    %c0_i32_1 = arith.constant 0 : i32
    return %c0_i32, %c0_i32_0 : i32, i32
  }
  func.func @transform_3(%arg0: i32) -> (i32, i32) {
    %c0_i32 = arith.constant 0 : i32
    %c0_i32_0 = arith.constant 0 : i32
    %c0_i32_1 = arith.constant 0 : i32
    return %c0_i32, %c0_i32_0 : i32, i32
  }
  func.func @transform_4(%arg0: i32) -> (i32, i32) {
    %c0_i32 = arith.constant 0 : i32
    %c0_i32_0 = arith.constant 0 : i32
    return %arg0, %c0_i32 : i32, i32
  }
  func.func @transform_5(%arg0: i32) -> (i32, i32) {
    %c0_i32 = arith.constant 0 : i32
    %c0_i32_0 = arith.constant 0 : i32
    return %arg0, %c0_i32 : i32, i32
  }
}

</mosaic_0001>

<llo_original>
// kernel: tpu_custom_call.1
$region0: #{tpu_custom_call.1}
  #allocation0 [shape = 'u32[]', space=smem, size = 0x4, offset = 0x4, fixed_abs, tag = 'smem constant byte address 0x4 - core index']
  #allocation1 [shape = 'u32[144,128]{1,0:T(1,128)}', space=vmem, size = 0x12000, scoped, tag = 'internal scratch']
  %s0 = inlined_call_operand.hbm [shape: f32[64,512], index: 0, kind: input, shape index: {}]
  %s1 = inlined_call_operand.hbm [shape: f32[64,512], index: 1, kind: input, shape index: {}]
  %s2 = inlined_call_operand.hbm [shape: f32[512,768], index: 2, kind: input, shape index: {}]
  %s3 = inlined_call_operand.hbm [shape: f32[384,128], index: 3, kind: input, shape index: {}]
  %s4 = inlined_call_operand.hbm [shape: f32[64,128], index: 4, kind: output, shape index: {0}]
  %s5 = inlined_call_operand.hbm [shape: f32[64,128], index: 5, kind: output, shape index: {1}]
  %6 = xla_tuple %s4, %s5
  %s7 = sld [smem:[#allocation0]]
  $region73: #{tpu_custom_call.1} parent=0
    _
  %s9 = ssub.s32 1, %s7
  %s10 = scalar_select 0, %s9, %s7
  $region1: #{tpu_custom_call.1} parent=0
    #allocation2 [shape = 'u8[131072]{0}', space=vmem, size = 0x20000, scoped, tag = 'input window, operand 0']
    #allocation3 [shape = 's32[2]{0}', space=sflag, size = 0x8, scoped, tag = 'scoped memory for tpu_custom_call.1']
    #allocation4 [shape = 's32[2]{0}', space=sflag, size = 0x8, scoped, tag = 'scoped memory for tpu_custom_call.1']
    #allocation5 [shape = 'u8[131072]{0}', space=vmem, size = 0x20000, scoped, tag = 'input window, operand 1']
    #allocation6 [shape = 's32[2]{0}', space=sflag, size = 0x8, scoped, tag = 'scoped memory for tpu_custom_call.1']
    #allocation7 [shape = 'u8[1572864]{0}', space=vmem, size = 0x180000, scoped, tag = 'input window, operand 2, single buffered']
    #allocation8 [shape = 'u8[196608]{0}', space=vmem, size = 0x30000, scoped, tag = 'input window, operand 3, single buffered']
    #allocation9 [shape = 's32[1]{0}', space=sflag, size = 0x4, scoped, tag = 'scoped memory for tpu_custom_call.1']
    #allocation10 [shape = 'u8[32768]{0}', space=vmem, size = 0x8000, scoped, tag = 'output window, operand 0']
    #allocation11 [shape = 'u8[32768]{0}', space=vmem, size = 0x8000, scoped, tag = 'output window, operand 1']
    #allocation12 [shape = 's32[2]{0}', space=sflag, size = 0x8, scoped, tag = 'scoped memory for tpu_custom_call.1']
    %11 = vsyncpa [#allocation3], 0
    %s12 = scalar_lea.sflag [#allocation3], 1
    %13 = vsyncpa %s12, 0
    %14 = vsyncpa [#allocation6], 0
    %s15 = scalar_lea.sflag [#allocation6], 1
    %16 = vsyncpa %s15, 0
    %17 = vsyncpa [#allocation9], 0
    %18 = vsyncpa [#allocation4], 0
    %s19 = scalar_lea.sflag [#allocation4], 1
    %20 = vsyncpa %s19, 0
    %21 = vsyncpa [#allocation12], 0
    %s22 = scalar_lea.sflag [#allocation12], 1
    %23 = vsyncpa %s22, 0
    loop: start=0, step=1, limit=4
    $region2: #{tpu_custom_call.1} parent=1 // loop_pre_header
      _
    $region3: #{tpu_custom_call.1} parent=1 // loop_header
      %s25 = sphi 0, %s29
      %p26 = scmp.ge.s32.totalorder %s25, 4
      %s35 = sphi 0, %s37
      %s38 = sphi 0, %s35
      %s39 = sphi 0, %s38
      %s55 = sphi 0, %s39
      %s61 = sphi 0, %s63
      %s64 = sphi 0, %s61
      %s65 = sphi 0, %s64
      %s81 = sphi 0, %s65
      %s85 = sphi 0, %s85
      %s87 = sphi 0, %s85
      %s88 = sphi 0, %s87
      %s102 = sphi 0, %s88
      %s106 = sphi 0, %s106
      %s108 = sphi 0, %s106
      %s109 = sphi 0, %s108
      %s123 = sphi 0, %s109
      %s129 = sphi 0, %s131
      %s132 = sphi 0, %s129
      %s133 = sphi 0, %s132
      %s149 = sphi 0, %s133
      %s155 = sphi 0, %s157
      %s158 = sphi 0, %s155
      %s159 = sphi 0, %s158
      %s175 = sphi 0, %s159
    $region4: #{tpu_custom_call.1} parent=1 // loop_header_branch
      %28 = sbr.rel (%p26) target = $region8
    $region5: #{tpu_custom_call.1} parent=1 // loop_body
      %s30 = ssub.s32 %s25, 1
      %s31 = ssub.s32 %s25, 2
      %s32 = sadd.s32 %s25, 1
      %s33 = ssub.s32 %s25, %s32
      %p34 = scmp.eq.s32.totalorder %s33, 0
      %s36 = sadd.s32 %s35, 1
      %s37 = scalar_select %p34, %s35, %s36
      %p40 = pneg %p34
      %p41 = scmp.eq.s32.totalorder %s25, 1
      %p42 = por %p40, %p41
      %p43 = scmp.ne.s32.totalorder %s35, %s38
      %p44 = scmp.eq.s32.totalorder %s25, 0
      %p45 = por %p43, %p44
      %p46 = scmp.ne.s32.totalorder %s35, %s38
      %p47 = scmp.eq.s32.totalorder %s30, 1
      %p48 = por %p46, %p47
      %p49 = scmp.ne.s32.totalorder %s38, %s39
      %p50 = scmp.eq.s32.totalorder %s30, 0
      %p51 = por %p49, %p50
      %p52 = scmp.ne.s32.totalorder %s38, %s39
      %p53 = scmp.eq.s32.totalorder %s31, 1
      %p54 = por %p52, %p53
      %p56 = scmp.ne.s32.totalorder %s39, %s55
      %p57 = scmp.eq.s32.totalorder %s31, 0
      %p58 = por %p56, %p57
      %s59 = ssub.s32 %s25, %s32
      %p60 = scmp.eq.s32.totalorder %s59, 0
      %s62 = sadd.s32 %s61, 1
      %s63 = scalar_select %p60, %s61, %s62
      %p66 = pneg %p60
      %p67 = scmp.eq.s32.totalorder %s25, 1
      %p68 = por %p66, %p67
      %p69 = scmp.ne.s32.totalorder %s61, %s64
      %p70 = scmp.eq.s32.totalorder %s25, 0
      %p71 = por %p69, %p70
      %p72 = scmp.ne.s32.totalorder %s61, %s64
      %p73 = scmp.eq.s32.totalorder %s30, 1
      %p74 = por %p72, %p73
      %p75 = scmp.ne.s32.totalorder %s64, %s65
      %p76 = scmp.eq.s32.totalorder %s30, 0
      %p77 = por %p75, %p76
      %p78 = scmp.ne.s32.totalorder %s64, %s65
      %p79 = scmp.eq.s32.totalorder %s31, 1
      %p80 = por %p78, %p79
      %p82 = scmp.ne.s32.totalorder %s65, %s81
      %p83 = scmp.eq.s32.totalorder %s31, 0
      %p84 = por %p82, %p83
      %s86 = sadd.s32 %s85, 1
      %p89 = scmp.eq.s32.totalorder %s25, 1
      %p90 = scmp.ne.s32.totalorder %s85, %s87
      %p91 = scmp.eq.s32.totalorder %s25, 0
      %p92 = por %p90, %p91
      %p93 = scmp.ne.s32.totalorder %s85, %s87
      %p94 = scmp.eq.s32.totalorder %s30, 1
      %p95 = por %p93, %p94
      %p96 = scmp.ne.s32.totalorder %s87, %s88
      %p97 = scmp.eq.s32.totalorder %s30, 0
      %p98 = por %p96, %p97
      %p99 = scmp.ne.s32.totalorder %s87, %s88
      %p100 = scmp.eq.s32.totalorder %s31, 1
      %p101 = por %p99, %p100
      %p103 = scmp.ne.s32.totalorder %s88, %s102
      %p104 = scmp.eq.s32.totalorder %s31, 0
      %p105 = por %p103, %p104
      %s107 = sadd.s32 %s106, 1
      %p110 = scmp.eq.s32.totalorder %s25, 1
      %p111 = scmp.ne.s32.totalorder %s106, %s108
      %p112 = scmp.eq.s32.totalorder %s25, 0
      %p113 = por %p111, %p112
      %p114 = scmp.ne.s32.totalorder %s106, %s108
      %p115 = scmp.eq.s32.totalorder %s30, 1
      %p116 = por %p114, %p115
      %p117 = scmp.ne.s32.totalorder %s108, %s109
      %p118 = scmp.eq.s32.totalorder %s30, 0
      %p119 = por %p117, %p118
      %p120 = scmp.ne.s32.totalorder %s108, %s109
      %p121 = scmp.eq.s32.totalorder %s31, 1
      %p122 = por %p120, %p121
      %p124 = scmp.ne.s32.totalorder %s109, %s123
      %p125 = scmp.eq.s32.totalorder %s31, 0
      %p126 = por %p124, %p125
      %s127 = ssub.s32 %s25, %s32
      %p128 = scmp.eq.s32.totalorder %s127, 0
      %s130 = sadd.s32 %s129, 1
      %s131 = scalar_select %p128, %s129, %s130
      %p134 = pneg %p128
      %p135 = scmp.eq.s32.totalorder %s25, 1
      %p136 = por %p134, %p135
      %p137 = scmp.ne.s32.totalorder %s129, %s132
      %p138 = scmp.eq.s32.totalorder %s25, 0
      %p139 = por %p137, %p138
      %p140 = scmp.ne.s32.totalorder %s129, %s132
      %p141 = scmp.eq.s32.totalorder %s30, 1
      %p142 = por %p140, %p141
      %p143 = scmp.ne.s32.totalorder %s132, %s133
      %p144 = scmp.eq.s32.totalorder %s30, 0
      %p145 = por %p143, %p144
      %p146 = scmp.ne.s32.totalorder %s132, %s133
      %p147 = scmp.eq.s32.totalorder %s31, 1
      %p148 = por %p146, %p147
      %p150 = scmp.ne.s32.totalorder %s133, %s149
      %p151 = scmp.eq.s32.totalorder %s31, 0
      %p152 = por %p150, %p151
      %s153 = ssub.s32 %s25, %s32
      %p154 = scmp.eq.s32.totalorder %s153, 0
      %s156 = sadd.s32 %s155, 1
      %s157 = scalar_select %p154, %s155, %s156
      %p160 = pneg %p154
      %p161 = scmp.eq.s32.totalorder %s25, 1
      %p162 = por %p160, %p161
      %p163 = scmp.ne.s32.totalorder %s155, %s158
      %p164 = scmp.eq.s32.totalorder %s25, 0
      %p165 = por %p163, %p164
      %p166 = scmp.ne.s32.totalorder %s155, %s158
      %p167 = scmp.eq.s32.totalorder %s30, 1
      %p168 = por %p166, %p167
      %p169 = scmp.ne.s32.totalorder %s158, %s159
      %p170 = scmp.eq.s32.totalorder %s30, 0
      %p171 = por %p169, %p170
      %p172 = scmp.ne.s32.totalorder %s158, %s159
      %p173 = scmp.eq.s32.totalorder %s31, 1
      %p174 = por %p172, %p173
      %p176 = scmp.ne.s32.totalorder %s159, %s175
      %p177 = scmp.eq.s32.totalorder %s31, 0
      %p178 = por %p176, %p177
      %p179 = scmp.le.s32.totalorder 1, %s25
      %p180 = scmp.lt.s32.totalorder %s25, 3
      %p181 = pnand %p179, %p180
      %p182 = pneg %p181
      // Predicated region
      $region9: #{tpu_custom_call.1} parent=5 // pred_check
        _
      $region10: #{tpu_custom_call.1} parent=5 // pred_check_branch
        %184 = sbr.rel (%p181) target = $region12
      $region11: #{tpu_custom_call.1} parent=5 // pred_region
        %s185 = ssub.s32 %s25, 1
        // Predicated region
        $region13: #{tpu_custom_call.1} parent=11 // pred_check
          %p186 = pneg %p98
        $region14: #{tpu_custom_call.1} parent=11 // pred_check_branch
          %188 = sbr.rel (%p186) target = $region16
        $region15: #{tpu_custom_call.1} parent=11 // pred_region
          %s190 = ssub.s32 49152, 49152
          %191 = vsyncadd [#allocation6], %s190
          %s192 = sshll.u32 [#allocation7], 4
          %s193 = int_to_ptr.vmem [resolvable:$true] %s192
          %198 = dma.hbm_to_vmem [thread:$0]  %s2, 49152, %s193, [#allocation6], 768, 768, 48
        $region16: #{tpu_custom_call.1} parent=11 // pred_fallthru
          _
        // Predicated region
        $region17: #{tpu_custom_call.1} parent=11 // pred_check
          %p199 = pneg %p119
        $region18: #{tpu_custom_call.1} parent=11 // pred_check_branch
          %201 = sbr.rel (%p199) target = $region20
        $region19: #{tpu_custom_call.1} parent=11 // pred_region
          %s203 = ssub.s32 6144, 6144
          %204 = vsyncadd [#allocation9], %s203
          %s205 = sshll.u32 [#allocation8], 4
          %s206 = int_to_ptr.vmem [resolvable:$true] %s205
          %211 = dma.hbm_to_vmem [thread:$0]  %s3, 6144, %s206, [#allocation9], 128, 128, 8
        $region20: #{tpu_custom_call.1} parent=11 // pred_fallthru
          _
      $region12: #{tpu_custom_call.1} parent=5 // pred_fallthru
        _
      %p212 = scmp.lt.s32.totalorder %s25, 2
      // Predicated region
      $region21: #{tpu_custom_call.1} parent=5 // pred_check
        %p213 = pneg %p212
      $region22: #{tpu_custom_call.1} parent=5 // pred_check_branch
        %215 = sbr.rel (%p213) target = $region24
      $region23: #{tpu_custom_call.1} parent=5 // pred_region
        // Predicated region
        $region25: #{tpu_custom_call.1} parent=23 // pred_check
          %p216 = pneg %p45
        $region26: #{tpu_custom_call.1} parent=23 // pred_check_branch
          %218 = sbr.rel (%p216) target = $region28
        $region27: #{tpu_custom_call.1} parent=23 // pred_region
          %s219 = sand.u32 %s35, 1
          %s220 = scalar_lea.sflag [#allocation3], %s219
          %s221 = sand.u32 %s35, 1
          %s222 = smul.addr %s221, 128
          %s223 = scalar_lea.vmem [#allocation2], %s222
          %s224 = smul.u32 4, %s25
          %s226 = ssub.s32 2048, 2048
          %227 = vsyncadd %s220, %s226
          %s228 = smul.addr %s224, 4
          %s229 = smul.addr %s228, 128
          %s230 = scalar_lea.hbm %s0, %s229
          %s231 = sshll.u32 %s223, 4
          %s232 = int_to_ptr.vmem [resolvable:$true] %s231
          %237 = dma.hbm_to_vmem [thread:$0]  %s230, 2048, %s232, %s220, 512, 512, 32
        $region28: #{tpu_custom_call.1} parent=23 // pred_fallthru
          _
        // Predicated region
        $region29: #{tpu_custom_call.1} parent=23 // pred_check
          %p238 = pneg %p71
        $region30: #{tpu_custom_call.1} parent=23 // pred_check_branch
          %240 = sbr.rel (%p238) target = $region32
        $region31: #{tpu_custom_call.1} parent=23 // pred_region
          %s241 = sand.u32 %s25, 1
          %s242 = scalar_lea.sflag [#allocation6], %s241
          %s243 = sand.u32 %s61, 1
          %s244 = smul.addr %s243, 128
          %s245 = scalar_lea.vmem [#allocation5], %s244
          %s246 = smul.u32 4, %s25
          %s248 = ssub.s32 2048, 2048
          %249 = vsyncadd %s242, %s248
          %s250 = smul.addr %s246, 4
          %s251 = smul.addr %s250, 128
          %s252 = scalar_lea.hbm %s1, %s251
          %s253 = sshll.u32 %s245, 4
          %s254 = int_to_ptr.vmem [resolvable:$true] %s253
          %259 = dma.hbm_to_vmem [thread:$0]  %s252, 2048, %s254, %s242, 512, 512, 32
        $region32: #{tpu_custom_call.1} parent=23 // pred_fallthru
          _
      $region24: #{tpu_custom_call.1} parent=5 // pred_fallthru
        _
      %p260 = scmp.le.s32.totalorder 1, %s25
      %p261 = scmp.lt.s32.totalorder %s25, 3
      %p262 = pnand %p260, %p261
      %p263 = pneg %p262
      // Predicated region
      $region33: #{tpu_custom_call.1} parent=5 // pred_check
        _
      $region34: #{tpu_custom_call.1} parent=5 // pred_check_branch
        %265 = sbr.rel (%p262) target = $region36
      $region35: #{tpu_custom_call.1} parent=5 // pred_region
        %s266 = ssub.s32 %s25, 1
        %s267 = sand.u32 %s38, 1
        %s268 = scalar_lea.sflag [#allocation3], %s267
        %s269 = sand.u32 %s38, 1
        %s270 = smul.addr %s269, 128
        %s271 = scalar_lea.vmem [#allocation2], %s270
        // Predicated region
        $region37: #{tpu_custom_call.1} parent=35 // pred_check
          %p272 = pneg %p51
        $region38: #{tpu_custom_call.1} parent=35 // pred_check_branch
          %274 = sbr.rel (%p272) target = $region40
        $region39: #{tpu_custom_call.1} parent=35 // pred_region
          %275 = dma.done %s268, 2048
        $region40: #{tpu_custom_call.1} parent=35 // pred_fallthru
          _
        %s276 = sand.u32 %s30, 1
        %s277 = scalar_lea.sflag [#allocation6], %s276
        %s278 = sand.u32 %s64, 1
        %s279 = smul.addr %s278, 128
        %s280 = scalar_lea.vmem [#allocation5], %s279
        // Predicated region
        $region41: #{tpu_custom_call.1} parent=35 // pred_check
          %p281 = pneg %p77
        $region42: #{tpu_custom_call.1} parent=35 // pred_check_branch
          %283 = sbr.rel (%p281) target = $region44
        $region43: #{tpu_custom_call.1} parent=35 // pred_region
          %284 = dma.done %s277, 2048
        $region44: #{tpu_custom_call.1} parent=35 // pred_fallthru
          _
        // Predicated region
        $region45: #{tpu_custom_call.1} parent=35 // pred_check
          %p285 = pneg %p98
        $region46: #{tpu_custom_call.1} parent=35 // pred_check_branch
          %287 = sbr.rel (%p285) target = $region48
        $region47: #{tpu_custom_call.1} parent=35 // pred_region
          %288 = dma.done [#allocation6], 49152
        $region48: #{tpu_custom_call.1} parent=35 // pred_fallthru
          _
        // Predicated region
        $region49: #{tpu_custom_call.1} parent=35 // pred_check
          %p289 = pneg %p119
        $region50: #{tpu_custom_call.1} parent=35 // pred_check_branch
          %291 = sbr.rel (%p289) target = $region52
        $region51: #{tpu_custom_call.1} parent=35 // pred_region
          %292 = dma.done [#allocation9], 6144
        $region52: #{tpu_custom_call.1} parent=35 // pred_fallthru
          _
        %s293 = sand.u32 %s38, 1
        %s294 = scalar_lea.sflag [#allocation3], %s293
        %s295 = sand.u32 %s38, 1
        %s296 = smul.addr %s295, 128
        %s297 = scalar_lea.vmem [#allocation2], %s296
        %p298 = pneg %p51
        %p299 = pneg %p48
        %s300 = sand.u32 %s30, 1
        %s301 = scalar_lea.sflag [#allocation6], %s300
        %s302 = sand.u32 %s64, 1
        %s303 = smul.addr %s302, 128
        %s304 = scalar_lea.vmem [#allocation5], %s303
        %p305 = pneg %p77
        %p306 = pneg %p74
        %p307 = pneg %p98
        %p308 = pneg %p95
        %p309 = pneg %p119
        %p310 = pneg %p116
        %p311 = pneg %p145
        %p312 = pneg %p142
        %s313 = sand.u32 %s132, 1
        %s314 = scalar_lea.sflag [#allocation4], %s313
        %s315 = sand.u32 %s132, 1
        %s316 = smul.addr %s315, 32
        %s317 = scalar_lea.vmem [#allocation10], %s316
        %p318 = pneg %p171
        %p319 = pneg %p168
        %s320 = sand.u32 %s158, 1
        %s321 = scalar_lea.sflag [#allocation12], %s320
        %s322 = sand.u32 %s158, 1
        %s323 = smul.addr %s322, 32
        %s324 = scalar_lea.vmem [#allocation11], %s323
        %s325 = smul.u32 4, %s30
        %s326 = smul.u32 4, %s30
        %s327 = smul.u32 4, %s30
        %s328 = smul.u32 4, %s30
        %v329 = vld [vmem:[%s271] sm:$0xff]
        %v330 = vld [vmem:[%s271 + $0x8] sm:$0xff]
        %v331 = vld [vmem:[%s271 + $0x10] sm:$0xff]
        %v332 = vld [vmem:[%s271 + $0x18] sm:$0xff]
        %v333 = vld [vmem:[%s271 + $0x20] sm:$0xff]
        %v334 = vld [vmem:[%s271 + $0x28] sm:$0xff]
        %v335 = vld [vmem:[%s271 + $0x30] sm:$0xff]
        %v336 = vld [vmem:[%s271 + $0x38] sm:$0xff]
        %v337 = vld [vmem:[%s271 + $0x40] sm:$0xff]
        %v338 = vld [vmem:[%s271 + $0x48] sm:$0xff]
        %v339 = vld [vmem:[%s271 + $0x50] sm:$0xff]
        %v340 = vld [vmem:[%s271 + $0x58] sm:$0xff]
        %v341 = vld [vmem:[%s271 + $0x60] sm:$0xff]
        %v342 = vld [vmem:[%s271 + $0x68] sm:$0xff]
        %v343 = vld [vmem:[%s271 + $0x70] sm:$0xff]
        %v344 = vld [vmem:[%s271 + $0x78] sm:$0xff]
        %v345 = vld [vmem:[%s280] sm:$0xff]
        %v346 = vld [vmem:[%s280 + $0x8] sm:$0xff]
        %v347 = vld [vmem:[%s280 + $0x10] sm:$0xff]
        %v348 = vld [vmem:[%s280 + $0x18] sm:$0xff]
        %v349 = vld [vmem:[%s280 + $0x20] sm:$0xff]
        %v350 = vld [vmem:[%s280 + $0x28] sm:$0xff]
        %v351 = vld [vmem:[%s280 + $0x30] sm:$0xff]
        %v352 = vld [vmem:[%s280 + $0x38] sm:$0xff]
        %v353 = vld [vmem:[%s280 + $0x40] sm:$0xff]
        %v354 = vld [vmem:[%s280 + $0x48] sm:$0xff]
        %v355 = vld [vmem:[%s280 + $0x50] sm:$0xff]
        %v356 = vld [vmem:[%s280 + $0x58] sm:$0xff]
        %v357 = vld [vmem:[%s280 + $0x60] sm:$0xff]
        %v358 = vld [vmem:[%s280 + $0x68] sm:$0xff]
        %v359 = vld [vmem:[%s280 + $0x70] sm:$0xff]
        %v360 = vld [vmem:[%s280 + $0x78] sm:$0xff]
        %v361 = vld [vmem:[#allocation7] sm:$0xff]
        %v362 = vld [vmem:[#allocation7 + $0x8] sm:$0xff]
        %v363 = vld [vmem:[#allocation7 + $0x10] sm:$0xff]
        %v364 = vld [vmem:[#allocation7 + $0x18] sm:$0xff]
        %v365 = vld [vmem:[#allocation7 + $0x20] sm:$0xff]
        %v366 = vld [vmem:[#allocation7 + $0x28] sm:$0xff]
        %v367 = vld [vmem:[#allocation7 + $0x30] sm:$0xff]
        %v368 = vld [vmem:[#allocation7 + $0x38] sm:$0xff]
        %v369 = vld [vmem:[#allocation7 + $0x40] sm:$0xff]
        %v370 = vld [vmem:[#allocation7 + $0x48] sm:$0xff]
        %v371 = vld [vmem:[#allocation7 + $0x50] sm:$0xff]
        %v372 = vld [vmem:[#allocation7 + $0x58] sm:$0xff]
        %v373 = vld [vmem:[#allocation7 + $0x60] sm:$0xff]
        %v374 = vld [vmem:[#allocation7 + $0x68] sm:$0xff]
        %v375 = vld [vmem:[#allocation7 + $0x70] sm:$0xff]
        %v376 = vld [vmem:[#allocation7 + $0x78] sm:$0xff]
        %v377 = vld [vmem:[#allocation7 + $0x80] sm:$0xff]
        %v378 = vld [vmem:[#allocation7 + $0x88] sm:$0xff]
        %v379 = vld [vmem:[#allocation7 + $0x90] sm:$0xff]
        %v380 = vld [vmem:[#allocation7 + $0x98] sm:$0xff]
        %v381 = vld [vmem:[#allocation7 + $0xa0] sm:$0xff]
        %v382 = vld [vmem:[#allocation7 + $0xa8] sm:$0xff]
        %v383 = vld [vmem:[#allocation7 + $0xb0] sm:$0xff]
        %v384 = vld [vmem:[#allocation7 + $0xb8] sm:$0xff]
        %v385 = vld [vmem:[#allocation7 + $0xc0] sm:$0xff]
        %v386 = vld [vmem:[#allocation7 + $0xc8] sm:$0xff]
        %v387 = vld [vmem:[#allocation7 + $0xd0] sm:$0xff]
        %v388 = vld [vmem:[#allocation7 + $0xd8] sm:$0xff]
        %v389 = vld [vmem:[#allocation7 + $0xe0] sm:$0xff]
        %v390 = vld [vmem:[#allocation7 + $0xe8] sm:$0xff]
        %v391 = vld [vmem:[#allocation7 + $0xf0] sm:$0xff]
        %v392 = vld [vmem:[#allocation7 + $0xf8] sm:$0xff]
        %v393 = vld [vmem:[#allocation7 + $0x100] sm:$0xff]
        %v394 = vld [vmem:[#allocation7 + $0x108] sm:$0xff]
        %v395 = vld [vmem:[#allocation7 + $0x110] sm:$0xff]
        %v396 = vld [vmem:[#allocation7 + $0x118] sm:$0xff]
        %v397 = vld [vmem:[#allocation7 + $0x120] sm:$0xff]
        %v398 = vld [vmem:[#allocation7 + $0x128] sm:$0xff]
        %v399 = vld [vmem:[#allocation7 + $0x130] sm:$0xff]
        %v400 = vld [vmem:[#allocation7 + $0x138] sm:$0xff]
        %v401 = vld [vmem:[#allocation7 + $0x140] sm:$0xff]
        %v402 = vld [vmem:[#allocation7 + $0x148] sm:$0xff]
        %v403 = vld [vmem:[#allocation7 + $0x150] sm:$0xff]
        %v404 = vld [vmem:[#allocation7 + $0x158] sm:$0xff]
        %v405 = vld [vmem:[#allocation7 + $0x160] sm:$0xff]
        %v406 = vld [vmem:[#allocation7 + $0x168] sm:$0xff]
        %v407 = vld [vmem:[#allocation7 + $0x170] sm:$0xff]
        %v408 = vld [vmem:[#allocation7 + $0x178] sm:$0xff]
        %v409 = vld [vmem:[#allocation7 + $0x180] sm:$0xff]
        %v410 = vld [vmem:[#allocation7 + $0x188] sm:$0xff]
        %v411 = vld [vmem:[#allocation7 + $0x190] sm:$0xff]
        %v412 = vld [vmem:[#allocation7 + $0x198] sm:$0xff]
        %v413 = vld [vmem:[#allocation7 + $0x1a0] sm:$0xff]
        %v414 = vld [vmem:[#allocation7 + $0x1a8] sm:$0xff]
        %v415 = vld [vmem:[#allocation7 + $0x1b0] sm:$0xff]
        %v416 = vld [vmem:[#allocation7 + $0x1b8] sm:$0xff]
        %v417 = vld [vmem:[#allocation7 + $0x1c0] sm:$0xff]
        %v418 = vld [vmem:[#allocation7 + $0x1c8] sm:$0xff]
        %v419 = vld [vmem:[#allocation7 + $0x1d0] sm:$0xff]
        %v420 = vld [vmem:[#allocation7 + $0x1d8] sm:$0xff]
        %v421 = vld [vmem:[#allocation7 + $0x1e0] sm:$0xff]
        %v422 = vld [vmem:[#allocation7 + $0x1e8] sm:$0xff]
        %v423 = vld [vmem:[#allocation7 + $0x1f0] sm:$0xff]
        %v424 = vld [vmem:[#allocation7 + $0x1f8] sm:$0xff]
        %v425 = vld [vmem:[#allocation7 + $0x200] sm:$0xff]
        %v426 = vld [vmem:[#allocation7 + $0x208] sm:$0xff]
        %v427 = vld [vmem:[#allocation7 + $0x210] sm:$0xff]
        %v428 = vld [vmem:[#allocation7 + $0x218] sm:$0xff]
        %v429 = vld [vmem:[#allocation7 + $0x220] sm:$0xff]
        %v430 = vld [vmem:[#allocation7 + $0x228] sm:$0xff]
        %v431 = vld [vmem:[#allocation7 + $0x230] sm:$0xff]
        %v432 = vld [vmem:[#allocation7 + $0x238] sm:$0xff]
        %v433 = vld [vmem:[#allocation7 + $0x240] sm:$0xff]
        %v434 = vld [vmem:[#allocation7 + $0x248] sm:$0xff]
        %v435 = vld [vmem:[#allocation7 + $0x250] sm:$0xff]
        %v436 = vld [vmem:[#allocation7 + $0x258] sm:$0xff]
        %v437 = vld [vmem:[#allocation7 + $0x260] sm:$0xff]
        %v438 = vld [vmem:[#allocation7 + $0x268] sm:$0xff]
        %v439 = vld [vmem:[#allocation7 + $0x270] sm:$0xff]
        %v440 = vld [vmem:[#allocation7 + $0x278] sm:$0xff]
        %v441 = vld [vmem:[#allocation7 + $0x280] sm:$0xff]
        %v442 = vld [vmem:[#allocation7 + $0x288] sm:$0xff]
        %v443 = vld [vmem:[#allocation7 + $0x290] sm:$0xff]
        %v444 = vld [vmem:[#allocation7 + $0x298] sm:$0xff]
        %v445 = vld [vmem:[#allocation7 + $0x2a0] sm:$0xff]
        %v446 = vld [vmem:[#allocation7 + $0x2a8] sm:$0xff]
        %v447 = vld [vmem:[#allocation7 + $0x2b0] sm:$0xff]
        %v448 = vld [vmem:[#allocation7 + $0x2b8] sm:$0xff]
        %v449 = vld [vmem:[#allocation7 + $0x2c0] sm:$0xff]
        %v450 = vld [vmem:[#allocation7 + $0x2c8] sm:$0xff]
        %v451 = vld [vmem:[#allocation7 + $0x2d0] sm:$0xff]
        %v452 = vld [vmem:[#allocation7 + $0x2d8] sm:$0xff]
        %v453 = vld [vmem:[#allocation7 + $0x2e0] sm:$0xff]
        %v454 = vld [vmem:[#allocation7 + $0x2e8] sm:$0xff]
        %v455 = vld [vmem:[#allocation7 + $0x2f0] sm:$0xff]
        %v456 = vld [vmem:[#allocation7 + $0x2f8] sm:$0xff]
        %v457 = vld [vmem:[#allocation7 + $0x300] sm:$0xff]
        %v458 = vld [vmem:[#allocation7 + $0x308] sm:$0xff]
        %v459 = vld [vmem:[#allocation7 + $0x310] sm:$0xff]
        %v460 = vld [vmem:[#allocation7 + $0x318] sm:$0xff]
        %v461 = vld [vmem:[#allocation7 + $0x320] sm:$0xff]
        %v462 = vld [vmem:[#allocation7 + $0x328] sm:$0xff]
        %v463 = vld [vmem:[#allocation7 + $0x330] sm:$0xff]
        %v464 = vld [vmem:[#allocation7 + $0x338] sm:$0xff]
        %v465 = vld [vmem:[#allocation7 + $0x340] sm:$0xff]
        %v466 = vld [vmem:[#allocation7 + $0x348] sm:$0xff]
        %v467 = vld [vmem:[#allocation7 + $0x350] sm:$0xff]
        %v468 = vld [vmem:[#allocation7 + $0x358] sm:$0xff]
        %v469 = vld [vmem:[#allocation7 + $0x360] sm:$0xff]
        %v470 = vld [vmem:[#allocation7 + $0x368] sm:$0xff]
        %v471 = vld [vmem:[#allocation7 + $0x370] sm:$0xff]
        %v472 = vld [vmem:[#allocation7 + $0x378] sm:$0xff]
        %v473 = vld [vmem:[#allocation7 + $0x380] sm:$0xff]
        %v474 = vld [vmem:[#allocation7 + $0x388] sm:$0xff]
        %v475 = vld [vmem:[#allocation7 + $0x390] sm:$0xff]
        %v476 = vld [vmem:[#allocation7 + $0x398] sm:$0xff]
        %v477 = vld [vmem:[#allocation7 + $0x3a0] sm:$0xff]
        %v478 = vld [vmem:[#allocation7 + $0x3a8] sm:$0xff]
        %v479 = vld [vmem:[#allocation7 + $0x3b0] sm:$0xff]
        %v480 = vld [vmem:[#allocation7 + $0x3b8] sm:$0xff]
        %v481 = vld [vmem:[#allocation7 + $0x3c0] sm:$0xff]
        %v482 = vld [vmem:[#allocation7 + $0x3c8] sm:$0xff]
        %v483 = vld [vmem:[#allocation7 + $0x3d0] sm:$0xff]
        %v484 = vld [vmem:[#allocation7 + $0x3d8] sm:$0xff]
        %v485 = vld [vmem:[#allocation7 + $0x3e0] sm:$0xff]
        %v486 = vld [vmem:[#allocation7 + $0x3e8] sm:$0xff]
        %v487 = vld [vmem:[#allocation7 + $0x3f0] sm:$0xff]
        %v488 = vld [vmem:[#allocation7 + $0x3f8] sm:$0xff]
        %v489 = vld [vmem:[#allocation7 + $0x400] sm:$0xff]
        %v490 = vld [vmem:[#allocation7 + $0x408] sm:$0xff]
        %v491 = vld [vmem:[#allocation7 + $0x410] sm:$0xff]
        %v492 = vld [vmem:[#allocation7 + $0x418] sm:$0xff]
        %v493 = vld [vmem:[#allocation7 + $0x420] sm:$0xff]
        %v494 = vld [vmem:[#allocation7 + $0x428] sm:$0xff]
        %v495 = vld [vmem:[#allocation7 + $0x430] sm:$0xff]
        %v496 = vld [vmem:[#allocation7 + $0x438] sm:$0xff]
        %v497 = vld [vmem:[#allocation7 + $0x440] sm:$0xff]
        %v498 = vld [vmem:[#allocation7 + $0x448] sm:$0xff]
        %v499 = vld [vmem:[#allocation7 + $0x450] sm:$0xff]
        %v500 = vld [vmem:[#allocation7 + $0x458] sm:$0xff]
        %v501 = vld [vmem:[#allocation7 + $0x460] sm:$0xff]
        %v502 = vld [vmem:[#allocation7 + $0x468] sm:$0xff]
        %v503 = vld [vmem:[#allocation7 + $0x470] sm:$0xff]
        %v504 = vld [vmem:[#allocation7 + $0x478] sm:$0xff]
        %v505 = vld [vmem:[#allocation7 + $0x480] sm:$0xff]
        %v506 = vld [vmem:[#allocation7 + $0x488] sm:$0xff]
        %v507 = vld [vmem:[#allocation7 + $0x490] sm:$0xff]
        %v508 = vld [vmem:[#allocation7 + $0x498] sm:$0xff]
        %v509 = vld [vmem:[#allocation7 + $0x4a0] sm:$0xff]
        %v510 = vld [vmem:[#allocation7 + $0x4a8] sm:$0xff]
        %v511 = vld [vmem:[#allocation7 + $0x4b0] sm:$0xff]
        %v512 = vld [vmem:[#allocation7 + $0x4b8] sm:$0xff]
        %v513 = vld [vmem:[#allocation7 + $0x4c0] sm:$0xff]
        %v514 = vld [vmem:[#allocation7 + $0x4c8] sm:$0xff]
        %v515 = vld [vmem:[#allocation7 + $0x4d0] sm:$0xff]
        %v516 = vld [vmem:[#allocation7 + $0x4d8] sm:$0xff]
        %v517 = vld [vmem:[#allocation7 + $0x4e0] sm:$0xff]
        %v518 = vld [vmem:[#allocation7 + $0x4e8] sm:$0xff]
        %v519 = vld [vmem:[#allocation7 + $0x4f0] sm:$0xff]
        %v520 = vld [vmem:[#allocation7 + $0x4f8] sm:$0xff]
        %v521 = vld [vmem:[#allocation7 + $0x500] sm:$0xff]
        %v522 = vld [vmem:[#allocation7 + $0x508] sm:$0xff]
        %v523 = vld [vmem:[#allocation7 + $0x510] sm:$0xff]
        %v524 = vld [vmem:[#allocation7 + $0x518] sm:$0xff]
        %v525 = vld [vmem:[#allocation7 + $0x520] sm:$0xff]
        %v526 = vld [vmem:[#allocation7 + $0x528] sm:$0xff]
        %v527 = vld [vmem:[#allocation7 + $0x530] sm:$0xff]
        %v528 = vld [vmem:[#allocation7 + $0x538] sm:$0xff]
        %v529 = vld [vmem:[#allocation7 + $0x540] sm:$0xff]
        %v530 = vld [vmem:[#allocation7 + $0x548] sm:$0xff]
        %v531 = vld [vmem:[#allocation7 + $0x550] sm:$0xff]
        %v532 = vld [vmem:[#allocation7 + $0x558] sm:$0xff]
        %v533 = vld [vmem:[#allocation7 + $0x560] sm:$0xff]
        %v534 = vld [vmem:[#allocation7 + $0x568] sm:$0xff]
        %v535 = vld [vmem:[#allocation7 + $0x570] sm:$0xff]
        %v536 = vld [vmem:[#allocation7 + $0x578] sm:$0xff]
        %v537 = vld [vmem:[#allocation7 + $0x580] sm:$0xff]
        %v538 = vld [vmem:[#allocation7 + $0x588] sm:$0xff]
        %v539 = vld [vmem:[#allocation7 + $0x590] sm:$0xff]
        %v540 = vld [vmem:[#allocation7 + $0x598] sm:$0xff]
        %v541 = vld [vmem:[#allocation7 + $0x5a0] sm:$0xff]
        %v542 = vld [vmem:[#allocation7 + $0x5a8] sm:$0xff]
        %v543 = vld [vmem:[#allocation7 + $0x5b0] sm:$0xff]
        %v544 = vld [vmem:[#allocation7 + $0x5b8] sm:$0xff]
        %v545 = vld [vmem:[#allocation7 + $0x5c0] sm:$0xff]
        %v546 = vld [vmem:[#allocation7 + $0x5c8] sm:$0xff]
        %v547 = vld [vmem:[#allocation7 + $0x5d0] sm:$0xff]
        %v548 = vld [vmem:[#allocation7 + $0x5d8] sm:$0xff]
        %v549 = vld [vmem:[#allocation7 + $0x5e0] sm:$0xff]
        %v550 = vld [vmem:[#allocation7 + $0x5e8] sm:$0xff]
        %v551 = vld [vmem:[#allocation7 + $0x5f0] sm:$0xff]
        %v552 = vld [vmem:[#allocation7 + $0x5f8] sm:$0xff]
        %v553 = vld [vmem:[#allocation7 + $0x600] sm:$0xff]
        %v554 = vld [vmem:[#allocation7 + $0x608] sm:$0xff]
        %v555 = vld [vmem:[#allocation7 + $0x610] sm:$0xff]
        %v556 = vld [vmem:[#allocation7 + $0x618] sm:$0xff]
        %v557 = vld [vmem:[#allocation7 + $0x620] sm:$0xff]
        %v558 = vld [vmem:[#allocation7 + $0x628] sm:$0xff]
        %v559 = vld [vmem:[#allocation7 + $0x630] sm:$0xff]
        %v560 = vld [vmem:[#allocation7 + $0x638] sm:$0xff]
        %v561 = vld [vmem:[#allocation7 + $0x640] sm:$0xff]
        %v562 = vld [vmem:[#allocation7 + $0x648] sm:$0xff]
        %v563 = vld [vmem:[#allocation7 + $0x650] sm:$0xff]
        %v564 = vld [vmem:[#allocation7 + $0x658] sm:$0xff]
        %v565 = vld [vmem:[#allocation7 + $0x660] sm:$0xff]
        %v566 = vld [vmem:[#allocation7 + $0x668] sm:$0xff]
        %v567 = vld [vmem:[#allocation7 + $0x670] sm:$0xff]
        %v568 = vld [vmem:[#allocation7 + $0x678] sm:$0xff]
        %v569 = vld [vmem:[#allocation7 + $0x680] sm:$0xff]
        %v570 = vld [vmem:[#allocation7 + $0x688] sm:$0xff]
        %v571 = vld [vmem:[#allocation7 + $0x690] sm:$0xff]
        %v572 = vld [vmem:[#allocation7 + $0x698] sm:$0xff]
        %v573 = vld [vmem:[#allocation7 + $0x6a0] sm:$0xff]
        %v574 = vld [vmem:[#allocation7 + $0x6a8] sm:$0xff]
        %v575 = vld [vmem:[#allocation7 + $0x6b0] sm:$0xff]
        %v576 = vld [vmem:[#allocation7 + $0x6b8] sm:$0xff]
        %v577 = vld [vmem:[#allocation7 + $0x6c0] sm:$0xff]
        %v578 = vld [vmem:[#allocation7 + $0x6c8] sm:$0xff]
        %v579 = vld [vmem:[#allocation7 + $0x6d0] sm:$0xff]
        %v580 = vld [vmem:[#allocation7 + $0x6d8] sm:$0xff]
        %v581 = vld [vmem:[#allocation7 + $0x6e0] sm:$0xff]
        %v582 = vld [vmem:[#allocation7 + $0x6e8] sm:$0xff]
        %v583 = vld [vmem:[#allocation7 + $0x6f0] sm:$0xff]
        %v584 = vld [vmem:[#allocation7 + $0x6f8] sm:$0xff]
        %v585 = vld [vmem:[#allocation7 + $0x700] sm:$0xff]
        %v586 = vld [vmem:[#allocation7 + $0x708] sm:$0xff]
        %v587 = vld [vmem:[#allocation7 + $0x710] sm:$0xff]
        %v588 = vld [vmem:[#allocation7 + $0x718] sm:$0xff]
        %v589 = vld [vmem:[#allocation7 + $0x720] sm:$0xff]
        %v590 = vld [vmem:[#allocation7 + $0x728] sm:$0xff]
        %v591 = vld [vmem:[#allocation7 + $0x730] sm:$0xff]
        %v592 = vld [vmem:[#allocation7 + $0x738] sm:$0xff]
        %v593 = vld [vmem:[#allocation7 + $0x740] sm:$0xff]
        %v594 = vld [vmem:[#allocation7 + $0x748] sm:$0xff]
        %v595 = vld [vmem:[#allocation7 + $0x750] sm:$0xff]
        %v596 = vld [vmem:[#allocation7 + $0x758] sm:$0xff]
        %v597 = vld [vmem:[#allocation7 + $0x760] sm:$0xff]
        %v598 = vld [vmem:[#allocation7 + $0x768] sm:$0xff]
        %v599 = vld [vmem:[#allocation7 + $0x770] sm:$0xff]
        %v600 = vld [vmem:[#allocation7 + $0x778] sm:$0xff]
        %v601 = vld [vmem:[#allocation7 + $0x780] sm:$0xff]
        %v602 = vld [vmem:[#allocation7 + $0x788] sm:$0xff]
        %v603 = vld [vmem:[#allocation7 + $0x790] sm:$0xff]
        %v604 = vld [vmem:[#allocation7 + $0x798] sm:$0xff]
        %v605 = vld [vmem:[#allocation7 + $0x7a0] sm:$0xff]
        %v606 = vld [vmem:[#allocation7 + $0x7a8] sm:$0xff]
        %v607 = vld [vmem:[#allocation7 + $0x7b0] sm:$0xff]
        %v608 = vld [vmem:[#allocation7 + $0x7b8] sm:$0xff]
        %v609 = vld [vmem:[#allocation7 + $0x7c0] sm:$0xff]
        %v610 = vld [vmem:[#allocation7 + $0x7c8] sm:$0xff]
        %v611 = vld [vmem:[#allocation7 + $0x7d0] sm:$0xff]
        %v612 = vld [vmem:[#allocation7 + $0x7d8] sm:$0xff]
        %v613 = vld [vmem:[#allocation7 + $0x7e0] sm:$0xff]
        %v614 = vld [vmem:[#allocation7 + $0x7e8] sm:$0xff]
        %v615 = vld [vmem:[#allocation7 + $0x7f0] sm:$0xff]
        %v616 = vld [vmem:[#allocation7 + $0x7f8] sm:$0xff]
        %v617 = vld [vmem:[#allocation7 + $0x800] sm:$0xff]
        %v618 = vld [vmem:[#allocation7 + $0x808] sm:$0xff]
        %v619 = vld [vmem:[#allocation7 + $0x810] sm:$0xff]
        %v620 = vld [vmem:[#allocation7 + $0x818] sm:$0xff]
        %v621 = vld [vmem:[#allocation7 + $0x820] sm:$0xff]
        %v622 = vld [vmem:[#allocation7 + $0x828] sm:$0xff]
        %v623 = vld [vmem:[#allocation7 + $0x830] sm:$0xff]
        %v624 = vld [vmem:[#allocation7 + $0x838] sm:$0xff]
        %v625 = vld [vmem:[#allocation7 + $0x840] sm:$0xff]
        %v626 = vld [vmem:[#allocation7 + $0x848] sm:$0xff]
        %v627 = vld [vmem:[#allocation7 + $0x850] sm:$0xff]
        %v628 = vld [vmem:[#allocation7 + $0x858] sm:$0xff]
        %v629 = vld [vmem:[#allocation7 + $0x860] sm:$0xff]
        %v630 = vld [vmem:[#allocation7 + $0x868] sm:$0xff]
        %v631 = vld [vmem:[#allocation7 + $0x870] sm:$0xff]
        %v632 = vld [vmem:[#allocation7 + $0x878] sm:$0xff]
        %v633 = vld [vmem:[#allocation7 + $0x880] sm:$0xff]
        %v634 = vld [vmem:[#allocation7 + $0x888] sm:$0xff]
        %v635 = vld [vmem:[#allocation7 + $0x890] sm:$0xff]
        %v636 = vld [vmem:[#allocation7 + $0x898] sm:$0xff]
        %v637 = vld [vmem:[#allocation7 + $0x8a0] sm:$0xff]
        %v638 = vld [vmem:[#allocation7 + $0x8a8] sm:$0xff]
        %v639 = vld [vmem:[#allocation7 + $0x8b0] sm:$0xff]
        %v640 = vld [vmem:[#allocation7 + $0x8b8] sm:$0xff]
        %v641 = vld [vmem:[#allocation7 + $0x8c0] sm:$0xff]
        %v642 = vld [vmem:[#allocation7 + $0x8c8] sm:$0xff]
        %v643 = vld [vmem:[#allocation7 + $0x8d0] sm:$0xff]
        %v644 = vld [vmem:[#allocation7 + $0x8d8] sm:$0xff]
        %v645 = vld [vmem:[#allocation7 + $0x8e0] sm:$0xff]
        %v646 = vld [vmem:[#allocation7 + $0x8e8] sm:$0xff]
        %v647 = vld [vmem:[#allocation7 + $0x8f0] sm:$0xff]
        %v648 = vld [vmem:[#allocation7 + $0x8f8] sm:$0xff]
        %v649 = vld [vmem:[#allocation7 + $0x900] sm:$0xff]
        %v650 = vld [vmem:[#allocation7 + $0x908] sm:$0xff]
        %v651 = vld [vmem:[#allocation7 + $0x910] sm:$0xff]
        %v652 = vld [vmem:[#allocation7 + $0x918] sm:$0xff]
        %v653 = vld [vmem:[#allocation7 + $0x920] sm:$0xff]
        %v654 = vld [vmem:[#allocation7 + $0x928] sm:$0xff]
        %v655 = vld [vmem:[#allocation7 + $0x930] sm:$0xff]
        %v656 = vld [vmem:[#allocation7 + $0x938] sm:$0xff]
        %v657 = vld [vmem:[#allocation7 + $0x940] sm:$0xff]
        %v658 = vld [vmem:[#allocation7 + $0x948] sm:$0xff]
        %v659 = vld [vmem:[#allocation7 + $0x950] sm:$0xff]
        %v660 = vld [vmem:[#allocation7 + $0x958] sm:$0xff]
        %v661 = vld [vmem:[#allocation7 + $0x960] sm:$0xff]
        %v662 = vld [vmem:[#allocation7 + $0x968] sm:$0xff]
        %v663 = vld [vmem:[#allocation7 + $0x970] sm:$0xff]
        %v664 = vld [vmem:[#allocation7 + $0x978] sm:$0xff]
        %v665 = vld [vmem:[#allocation7 + $0x980] sm:$0xff]
        %v666 = vld [vmem:[#allocation7 + $0x988] sm:$0xff]
        %v667 = vld [vmem:[#allocation7 + $0x990] sm:$0xff]
        %v668 = vld [vmem:[#allocation7 + $0x998] sm:$0xff]
        %v669 = vld [vmem:[#allocation7 + $0x9a0] sm:$0xff]
        %v670 = vld [vmem:[#allocation7 + $0x9a8] sm:$0xff]
        %v671 = vld [vmem:[#allocation7 + $0x9b0] sm:$0xff]
        %v672 = vld [vmem:[#allocation7 + $0x9b8] sm:$0xff]
        %v673 = vld [vmem:[#allocation7 + $0x9c0] sm:$0xff]
        %v674 = vld [vmem:[#allocation7 + $0x9c8] sm:$0xff]
        %v675 = vld [vmem:[#allocation7 + $0x9d0] sm:$0xff]
        %v676 = vld [vmem:[#allocation7 + $0x9d8] sm:$0xff]
        %v677 = vld [vmem:[#allocation7 + $0x9e0] sm:$0xff]
        %v678 = vld [vmem:[#allocation7 + $0x9e8] sm:$0xff]
        %v679 = vld [vmem:[#allocation7 + $0x9f0] sm:$0xff]
        %v680 = vld [vmem:[#allocation7 + $0x9f8] sm:$0xff]
        %v681 = vld [vmem:[#allocation7 + $0xa00] sm:$0xff]
        %v682 = vld [vmem:[#allocation7 + $0xa08] sm:$0xff]
        %v683 = vld [vmem:[#allocation7 + $0xa10] sm:$0xff]
        %v684 = vld [vmem:[#allocation7 + $0xa18] sm:$0xff]
        %v685 = vld [vmem:[#allocation7 + $0xa20] sm:$0xff]
        %v686 = vld [vmem:[#allocation7 + $0xa28] sm:$0xff]
        %v687 = vld [vmem:[#allocation7 + $0xa30] sm:$0xff]
        %v688 = vld [vmem:[#allocation7 + $0xa38] sm:$0xff]
        %v689 = vld [vmem:[#allocation7 + $0xa40] sm:$0xff]
        %v690 = vld [vmem:[#allocation7 + $0xa48] sm:$0xff]
        %v691 = vld [vmem:[#allocation7 + $0xa50] sm:$0xff]
        %v692 = vld [vmem:[#allocation7 + $0xa58] sm:$0xff]
        %v693 = vld [vmem:[#allocation7 + $0xa60] sm:$0xff]
        %v694 = vld [vmem:[#allocation7 + $0xa68] sm:$0xff]
        %v695 = vld [vmem:[#allocation7 + $0xa70] sm:$0xff]
        %v696 = vld [vmem:[#allocation7 + $0xa78] sm:$0xff]
        %v697 = vld [vmem:[#allocation7 + $0xa80] sm:$0xff]
        %v698 = vld [vmem:[#allocation7 + $0xa88] sm:$0xff]
        %v699 = vld [vmem:[#allocation7 + $0xa90] sm:$0xff]
        %v700 = vld [vmem:[#allocation7 + $0xa98] sm:$0xff]
        %v701 = vld [vmem:[#allocation7 + $0xaa0] sm:$0xff]
        %v702 = vld [vmem:[#allocation7 + $0xaa8] sm:$0xff]
        %v703 = vld [vmem:[#allocation7 + $0xab0] sm:$0xff]
        %v704 = vld [vmem:[#allocation7 + $0xab8] sm:$0xff]
        %v705 = vld [vmem:[#allocation7 + $0xac0] sm:$0xff]
        %v706 = vld [vmem:[#allocation7 + $0xac8] sm:$0xff]
        %v707 = vld [vmem:[#allocation7 + $0xad0] sm:$0xff]
        %v708 = vld [vmem:[#allocation7 + $0xad8] sm:$0xff]
        %v709 = vld [vmem:[#allocation7 + $0xae0] sm:$0xff]
        %v710 = vld [vmem:[#allocation7 + $0xae8] sm:$0xff]
        %v711 = vld [vmem:[#allocation7 + $0xaf0] sm:$0xff]
        %v712 = vld [vmem:[#allocation7 + $0xaf8] sm:$0xff]
        %v713 = vld [vmem:[#allocation7 + $0xb00] sm:$0xff]
        %v714 = vld [vmem:[#allocation7 + $0xb08] sm:$0xff]
        %v715 = vld [vmem:[#allocation7 + $0xb10] sm:$0xff]
        %v716 = vld [vmem:[#allocation7 + $0xb18] sm:$0xff]
        %v717 = vld [vmem:[#allocation7 + $0xb20] sm:$0xff]
        %v718 = vld [vmem:[#allocation7 + $0xb28] sm:$0xff]
        %v719 = vld [vmem:[#allocation7 + $0xb30] sm:$0xff]
        %v720 = vld [vmem:[#allocation7 + $0xb38] sm:$0xff]
        %v721 = vld [vmem:[#allocation7 + $0xb40] sm:$0xff]
        %v722 = vld [vmem:[#allocation7 + $0xb48] sm:$0xff]
        %v723 = vld [vmem:[#allocation7 + $0xb50] sm:$0xff]
        %v724 = vld [vmem:[#allocation7 + $0xb58] sm:$0xff]
        %v725 = vld [vmem:[#allocation7 + $0xb60] sm:$0xff]
        %v726 = vld [vmem:[#allocation7 + $0xb68] sm:$0xff]
        %v727 = vld [vmem:[#allocation7 + $0xb70] sm:$0xff]
        %v728 = vld [vmem:[#allocation7 + $0xb78] sm:$0xff]
        %v729 = vld [vmem:[#allocation7 + $0xb80] sm:$0xff]
        %v730 = vld [vmem:[#allocation7 + $0xb88] sm:$0xff]
        %v731 = vld [vmem:[#allocation7 + $0xb90] sm:$0xff]
        %v732 = vld [vmem:[#allocation7 + $0xb98] sm:$0xff]
        %v733 = vld [vmem:[#allocation7 + $0xba0] sm:$0xff]
        %v734 = vld [vmem:[#allocation7 + $0xba8] sm:$0xff]
        %v735 = vld [vmem:[#allocation7 + $0xbb0] sm:$0xff]
        %v736 = vld [vmem:[#allocation7 + $0xbb8] sm:$0xff]
        %v737 = vld [vmem:[#allocation7 + $0xbc0] sm:$0xff]
        %v738 = vld [vmem:[#allocation7 + $0xbc8] sm:$0xff]
        %v739 = vld [vmem:[#allocation7 + $0xbd0] sm:$0xff]
        %v740 = vld [vmem:[#allocation7 + $0xbd8] sm:$0xff]
        %v741 = vld [vmem:[#allocation7 + $0xbe0] sm:$0xff]
        %v742 = vld [vmem:[#allocation7 + $0xbe8] sm:$0xff]
        %v743 = vld [vmem:[#allocation7 + $0xbf0] sm:$0xff]
        %v744 = vld [vmem:[#allocation7 + $0xbf8] sm:$0xff]
        %745 = vmatprep.subr.mxu0 %v362
        %746 = vmatpush1.msra.mxu0 %v361
        %747 = vmatprep.subr.mxu0 %v368
        %748 = vmatpush1.msra.mxu0 %v367
        %749 = vmatprep.subr.mxu0 %v374
        %750 = vmatpush1.msra.mxu0 %v373
        %751 = vmatprep.subr.mxu0 %v380
        %752 = vmatpush1.msra.mxu0 %v379
        %753 = vmatprep.subr.mxu0 %v386
        %754 = vmatpush1.msra.mxu0 %v385
        %755 = vmatprep.subr.mxu0 %v392
        %756 = vmatpush1.msra.mxu0 %v391
        %757 = vmatprep.subr.mxu0 %v398
        %758 = vmatpush1.msra.mxu0 %v397
        %759 = vmatprep.subr.mxu0 %v404
        %760 = vmatpush1.msra.mxu0 %v403
        %761 = vmatprep.subr.mxu0 %v410
        %762 = vmatpush1.msra.mxu0 %v409
        %763 = vmatprep.subr.mxu0 %v416
        %764 = vmatpush1.msra.mxu0 %v415
        %765 = vmatprep.subr.mxu0 %v422
        %766 = vmatpush1.msra.mxu0 %v421
        %767 = vmatprep.subr.mxu0 %v428
        %768 = vmatpush1.msra.mxu0 %v427
        %769 = vmatprep.subr.mxu0 %v434
        %770 = vmatpush1.msra.mxu0 %v433
        %771 = vmatprep.subr.mxu0 %v440
        %772 = vmatpush1.msra.mxu0 %v439
        %773 = vmatprep.subr.mxu0 %v446
        %774 = vmatpush1.msra.mxu0 %v445
        %775 = vmatprep.subr.mxu0 %v452
        %776 = vmatpush1.msra.mxu0 %v451
        %777 = vmatprep.subr.mxu0 %v458
        %778 = vmatpush1.msra.mxu0 %v457
        %779 = vmatprep.subr.mxu0 %v464
        %780 = vmatpush1.msra.mxu0 %v463
        %781 = vmatprep.subr.mxu0 %v470
        %782 = vmatpush1.msra.mxu0 %v469
        %783 = vmatprep.subr.mxu0 %v476
        %784 = vmatpush1.msra.mxu0 %v475
        %785 = vmatprep.subr.mxu0 %v482
        %786 = vmatpush1.msra.mxu0 %v481
        %787 = vmatprep.subr.mxu0 %v488
        %788 = vmatpush1.msra.mxu0 %v487
        %789 = vmatprep.subr.mxu0 %v494
        %790 = vmatpush1.msra.mxu0 %v493
        %791 = vmatprep.subr.mxu0 %v500
        %792 = vmatpush1.msra.mxu0 %v499
        %793 = vmatprep.subr.mxu0 %v506
        %794 = vmatpush1.msra.mxu0 %v505
        %795 = vmatprep.subr.mxu0 %v512
        %796 = vmatpush1.msra.mxu0 %v511
        %797 = vmatprep.subr.mxu0 %v518
        %798 = vmatpush1.msra.mxu0 %v517
        %799 = vmatprep.subr.mxu0 %v524
        %800 = vmatpush1.msra.mxu0 %v523
        %801 = vmatprep.subr.mxu0 %v530
        %802 = vmatpush1.msra.mxu0 %v529
        %803 = vmatprep.subr.mxu0 %v536
        %804 = vmatpush1.msra.mxu0 %v535
        %805 = vmatprep.subr.mxu0 %v542
        %806 = vmatpush1.msra.mxu0 %v541
        %807 = vmatprep.subr.mxu0 %v548
        %808 = vmatpush1.msra.mxu0 %v547
        %809 = vmatprep.mubr.f32.mxu0 %v330
        %810 = vmatmul.mubr.f32.gmra.mrb[0].mxu0 %v329
        %v811 = vpop.f32.mrb[0].mxu0
        %v812 = vadd.f32 0.0, %v811
        %v813 = vpop.f32.mrb[0].mxu0
        %v814 = vadd.f32 0.0, %v813
        %815 = vmatprep.mubr.f32.mxu0 %v334
        %816 = vmatmul.mubr.f32.gmra.mrb[0].mxu0 %v333
        %v817 = vpop.f32.mrb[0].mxu0
        %v818 = vadd.f32 0.0, %v817
        %v819 = vpop.f32.mrb[0].mxu0
        %v820 = vadd.f32 0.0, %v819
        %821 = vmatprep.mubr.f32.mxu0 %v338
        %822 = vmatmul.mubr.f32.gmra.mrb[0].mxu0 %v337
        %v823 = vpop.f32.mrb[0].mxu0
        %v824 = vadd.f32 0.0, %v823
        %v825 = vpop.f32.mrb[0].mxu0
        %v826 = vadd.f32 0.0, %v825
        %827 = vmatprep.mubr.f32.mxu0 %v342
        %828 = vmatmul.mubr.f32.gmra.mrb[0].mxu0 %v341
        %v829 = vpop.f32.mrb[0].mxu0
        %v830 = vadd.f32 0.0, %v829
        %v831 = vpop.f32.mrb[0].mxu0
        %v832 = vadd.f32 0.0, %v831
        %833 = vmatprep.mubr.f32.mxu0 %v346
        %834 = vmatmul.mubr.f32.gmra.mrb[0].mxu0 %v345
        %v835 = vpop.f32.mrb[0].mxu0
        %v836 = vadd.f32 0.0, %v835
        %v837 = vpop.f32.mrb[0].mxu0
        %v838 = vadd.f32 0.0, %v837
        %839 = vmatprep.mubr.f32.mxu0 %v350
        %840 = vmatmul.mubr.f32.gmra.mrb[0].mxu0 %v349
        %v841 = vpop.f32.mrb[0].mxu0
        %v842 = vadd.f32 0.0, %v841
        %v843 = vpop.f32.mrb[0].mxu0
        %v844 = vadd.f32 0.0, %v843
        %845 = vmatprep.mubr.f32.mxu0 %v354
        %846 = vmatmul.mubr.f32.gmra.mrb[0].mxu0 %v353
        %v847 = vpop.f32.mrb[0].mxu0
        %v848 = vadd.f32 0.0, %v847
        %v849 = vpop.f32.mrb[0].mxu0
        %v850 = vadd.f32 0.0, %v849
        %851 = vmatprep.mubr.f32.mxu0 %v358
        %852 = vmatmul.mubr.f32.gmra.mrb[0].mxu0 %v357
        %v853 = vpop.f32.mrb[0].mxu0
        %v854 = vadd.f32 0.0, %v853
        %v855 = vpop.f32.mrb[0].mxu0
        %v856 = vadd.f32 0.0, %v855
        %857 = vdwg.mxu0
        %858 = vmatprep.subr.mxu0 %v554
        %859 = vmatpush1.msra.mxu0 %v553
        %860 = vmatprep.subr.mxu0 %v560
        %861 = vmatpush1.msra.mxu0 %v559
        %862 = vmatprep.subr.mxu0 %v566
        %863 = vmatpush1.msra.mxu0 %v565
        %864 = vmatprep.subr.mxu0 %v572
        %865 = vmatpush1.msra.mxu0 %v571
        %866 = vmatprep.subr.mxu0 %v578
        %867 = vmatpush1.msra.mxu0 %v577
        %868 = vmatprep.subr.mxu0 %v584
        %869 = vmatpush1.msra.mxu0 %v583
        %870 = vmatprep.subr.mxu0 %v590
        %871 = vmatpush1.msra.mxu0 %v589
        %872 = vmatprep.subr.mxu0 %v596
        %873 = vmatpush1.msra.mxu0 %v595
        %874 = vmatprep.subr.mxu0 %v602
        %875 = vmatpush1.msra.mxu0 %v601
        %876 = vmatprep.subr.mxu0 %v608
        %877 = vmatpush1.msra.mxu0 %v607
        %878 = vmatprep.subr.mxu0 %v614
        %879 = vmatpush1.msra.mxu0 %v613
        %880 = vmatprep.subr.mxu0 %v620
        %881 = vmatpush1.msra.mxu0 %v619
        %882 = vmatprep.subr.mxu0 %v626
        %883 = vmatpush1.msra.mxu0 %v625
        %884 = vmatprep.subr.mxu0 %v632
        %885 = vmatpush1.msra.mxu0 %v631
        %886 = vmatprep.subr.mxu0 %v638
        %887 = vmatpush1.msra.mxu0 %v637
        %888 = vmatprep.subr.mxu0 %v644
        %889 = vmatpush1.msra.mxu0 %v643
        %890 = vmatprep.subr.mxu0 %v650
        %891 = vmatpush1.msra.mxu0 %v649
        %892 = vmatprep.subr.mxu0 %v656
        %893 = vmatpush1.msra.mxu0 %v655
        %894 = vmatprep.subr.mxu0 %v662
        %895 = vmatpush1.msra.mxu0 %v661
        %896 = vmatprep.subr.mxu0 %v668
        %897 = vmatpush1.msra.mxu0 %v667
        %898 = vmatprep.subr.mxu0 %v674
        %899 = vmatpush1.msra.mxu0 %v673
        %900 = vmatprep.subr.mxu0 %v680
        %901 = vmatpush1.msra.mxu0 %v679
        %902 = vmatprep.subr.mxu0 %v686
        %903 = vmatpush1.msra.mxu0 %v685
        %904 = vmatprep.subr.mxu0 %v692
        %905 = vmatpush1.msra.mxu0 %v691
        %906 = vmatprep.subr.mxu0 %v698
        %907 = vmatpush1.msra.mxu0 %v697
        %908 = vmatprep.subr.mxu0 %v704
        %909 = vmatpush1.msra.mxu0 %v703
        %910 = vmatprep.subr.mxu0 %v710
        %911 = vmatpush1.msra.mxu0 %v709
        %912 = vmatprep.subr.mxu0 %v716
        %913 = vmatpush1.msra.mxu0 %v715
        %914 = vmatprep.subr.mxu0 %v722
        %915 = vmatpush1.msra.mxu0 %v721
        %916 = vmatprep.subr.mxu0 %v728
        %917 = vmatpush1.msra.mxu0 %v727
        %918 = vmatprep.subr.mxu0 %v734
        %919 = vmatpush1.msra.mxu0 %v733
        %920 = vmatprep.subr.mxu0 %v740
        %921 = vmatpush1.msra.mxu0 %v739
        %922 = vmatprep.mubr.f32.mxu0 %v332
        %923 = vmatmul.mubr.f32.gmra.mrb[0].mxu0 %v331
        %v924 = vpop.f32.mrb[0].mxu0
        %v925 = vadd.f32 %v812, %v924
        %v926 = vpop.f32.mrb[0].mxu0
        %v927 = vadd.f32 %v814, %v926
        %928 = vmatprep.mubr.f32.mxu0 %v336
        %929 = vmatmul.mubr.f32.gmra.mrb[0].mxu0 %v335
        %v930 = vpop.f32.mrb[0].mxu0
        %v931 = vadd.f32 %v818, %v930
        %v932 = vpop.f32.mrb[0].mxu0
        %v933 = vadd.f32 %v820, %v932
        %934 = vmatprep.mubr.f32.mxu0 %v340
        %935 = vmatmul.mubr.f32.gmra.mrb[0].mxu0 %v339
        %v936 = vpop.f32.mrb[0].mxu0
        %v937 = vadd.f32 %v824, %v936
        %v938 = vpop.f32.mrb[0].mxu0
        %v939 = vadd.f32 %v826, %v938
        %940 = vmatprep.mubr.f32.mxu0 %v344
        %941 = vmatmul.mubr.f32.gmra.mrb[0].mxu0 %v343
        %v942 = vpop.f32.mrb[0].mxu0
        %v943 = vadd.f32 %v830, %v942
        %v944 = vpop.f32.mrb[0].mxu0
        %v945 = vadd.f32 %v832, %v944
        %946 = vmatprep.mubr.f32.mxu0 %v348
        %947 = vmatmul.mubr.f32.gmra.mrb[0].mxu0 %v347
        %v948 = vpop.f32.mrb[0].mxu0
        %v949 = vadd.f32 %v836, %v948
        %v950 = vpop.f32.mrb[0].mxu0
        %v951 = vadd.f32 %v838, %v950
        %952 = vmatprep.mubr.f32.mxu0 %v352
        %953 = vmatmul.mubr.f32.gmra.mrb[0].mxu0 %v351
        %v954 = vpop.f32.mrb[0].mxu0
        %v955 = vadd.f32 %v842, %v954
        %v956 = vpop.f32.mrb[0].mxu0
        %v957 = vadd.f32 %v844, %v956
        %958 = vmatprep.mubr.f32.mxu0 %v356
        %959 = vmatmul.mubr.f32.gmra.mrb[0].mxu0 %v355
        %v960 = vpop.f32.mrb[0].mxu0
        %v961 = vadd.f32 %v848, %v960
        %v962 = vpop.f32.mrb[0].mxu0
        %v963 = vadd.f32 %v850, %v962
        %964 = vmatprep.mubr.f32.mxu0 %v360
        %965 = vmatmul.mubr.f32.gmra.mrb[0].mxu0 %v359
        %v966 = vpop.f32.mrb[0].mxu0
        %v967 = vadd.f32 %v854, %v966
        %v968 = vpop.f32.mrb[0].mxu0
        %v969 = vadd.f32 %v856, %v968
        %970 = vdwg.mxu0
        %971 = vmatprep.subr.mxu0 %v364
        %972 = vmatpush1.msra.mxu0 %v363
        %973 = vmatprep.subr.mxu0 %v370
        %974 = vmatpush1.msra.mxu0 %v369
        %975 = vmatprep.subr.mxu0 %v376
        %976 = vmatpush1.msra.mxu0 %v375
        %977 = vmatprep.subr.mxu0 %v382
        %978 = vmatpush1.msra.mxu0 %v381
        %979 = vmatprep.subr.mxu0 %v388
        %980 = vmatpush1.msra.mxu0 %v387
        %981 = vmatprep.subr.mxu0 %v394
        %982 = vmatpush1.msra.mxu0 %v393
        %983 = vmatprep.subr.mxu0 %v400
        %984 = vmatpush1.msra.mxu0 %v399
        %985 = vmatprep.subr.mxu0 %v406
        %986 = vmatpush1.msra.mxu0 %v405
        %987 = vmatprep.subr.mxu0 %v412
        %988 = vmatpush1.msra.mxu0 %v411
        %989 = vmatprep.subr.mxu0 %v418
        %990 = vmatpush1.msra.mxu0 %v417
        %991 = vmatprep.subr.mxu0 %v424
        %992 = vmatpush1.msra.mxu0 %v423
        %993 = vmatprep.subr.mxu0 %v430
        %994 = vmatpush1.msra.mxu0 %v429
        %995 = vmatprep.subr.mxu0 %v436
        %996 = vmatpush1.msra.mxu0 %v435
        %997 = vmatprep.subr.mxu0 %v442
        %998 = vmatpush1.msra.mxu0 %v441
        %999 = vmatprep.subr.mxu0 %v448
        %1000 = vmatpush1.msra.mxu0 %v447
        %1001 = vmatprep.subr.mxu0 %v454
        %1002 = vmatpush1.msra.mxu0 %v453
        %1003 = vmatprep.subr.mxu0 %v460
        %1004 = vmatpush1.msra.mxu0 %v459
        %1005 = vmatprep.subr.mxu0 %v466
        %1006 = vmatpush1.msra.mxu0 %v465
        %1007 = vmatprep.subr.mxu0 %v472
        %1008 = vmatpush1.msra.mxu0 %v471
        %1009 = vmatprep.subr.mxu0 %v478
        %1010 = vmatpush1.msra.mxu0 %v477
        %1011 = vmatprep.subr.mxu0 %v484
        %1012 = vmatpush1.msra.mxu0 %v483
        %1013 = vmatprep.subr.mxu0 %v490
        %1014 = vmatpush1.msra.mxu0 %v489
        %1015 = vmatprep.subr.mxu0 %v496
        %1016 = vmatpush1.msra.mxu0 %v495
        %1017 = vmatprep.subr.mxu0 %v502
        %1018 = vmatpush1.msra.mxu0 %v501
        %1019 = vmatprep.subr.mxu0 %v508
        %1020 = vmatpush1.msra.mxu0 %v507
        %1021 = vmatprep.subr.mxu0 %v514
        %1022 = vmatpush1.msra.mxu0 %v513
        %1023 = vmatprep.subr.mxu0 %v520
        %1024 = vmatpush1.msra.mxu0 %v519
        %1025 = vmatprep.subr.mxu0 %v526
        %1026 = vmatpush1.msra.mxu0 %v525
        %1027 = vmatprep.subr.mxu0 %v532
        %1028 = vmatpush1.msra.mxu0 %v531
        %1029 = vmatprep.subr.mxu0 %v538
        %1030 = vmatpush1.msra.mxu0 %v537
        %1031 = vmatprep.subr.mxu0 %v544
        %1032 = vmatpush1.msra.mxu0 %v543
        %1033 = vmatprep.subr.mxu0 %v550
        %1034 = vmatpush1.msra.mxu0 %v549
        %1035 = vmatprep.mubr.f32.mxu0 %v330
        %1036 = vmatmul.mubr.f32.gmra.mrb[0].mxu0 %v329
        %v1037 = vpop.f32.mrb[0].mxu0
        %v1038 = vadd.f32 0.0, %v1037
        %v1039 = vpop.f32.mrb[0].mxu0
        %v1040 = vadd.f32 0.0, %v1039
        %1041 = vmatprep.mubr.f32.mxu0 %v334
        %1042 = vmatmul.mubr.f32.gmra.mrb[0].mxu0 %v333
        %v1043 = vpop.f32.mrb[0].mxu0
        %v1044 = vadd.f32 0.0, %v1043
        %v1045 = vpop.f32.mrb[0].mxu0
        %v1046 = vadd.f32 0.0, %v1045
        %1047 = vmatprep.mubr.f32.mxu0 %v338
        %1048 = vmatmul.mubr.f32.gmra.mrb[0].mxu0 %v337
        %v1049 = vpop.f32.mrb[0].mxu0
        %v1050 = vadd.f32 0.0, %v1049
        %v1051 = vpop.f32.mrb[0].mxu0
        %v1052 = vadd.f32 0.0, %v1051
        %1053 = vmatprep.mubr.f32.mxu0 %v342
        %1054 = vmatmul.mubr.f32.gmra.mrb[0].mxu0 %v341
        %v1055 = vpop.f32.mrb[0].mxu0
        %v1056 = vadd.f32 0.0, %v1055
        %v1057 = vpop.f32.mrb[0].mxu0
        %v1058 = vadd.f32 0.0, %v1057
        %1059 = vmatprep.mubr.f32.mxu0 %v346
        %1060 = vmatmul.mubr.f32.gmra.mrb[0].mxu0 %v345
        %v1061 = vpop.f32.mrb[0].mxu0
        %v1062 = vadd.f32 0.0, %v1061
        %v1063 = vpop.f32.mrb[0].mxu0
        %v1064 = vadd.f32 0.0, %v1063
        %1065 = vmatprep.mubr.f32.mxu0 %v350
        %1066 = vmatmul.mubr.f32.gmra.mrb[0].mxu0 %v349
        %v1067 = vpop.f32.mrb[0].mxu0
        %v1068 = vadd.f32 0.0, %v1067
        %v1069 = vpop.f32.mrb[0].mxu0
        %v1070 = vadd.f32 0.0, %v1069
        %1071 = vmatprep.mubr.f32.mxu0 %v354
        %1072 = vmatmul.mubr.f32.gmra.mrb[0].mxu0 %v353
        %v1073 = vpop.f32.mrb[0].mxu0
        %v1074 = vadd.f32 0.0, %v1073
        %v1075 = vpop.f32.mrb[0].mxu0
        %v1076 = vadd.f32 0.0, %v1075
        %1077 = vmatprep.mubr.f32.mxu0 %v358
        %1078 = vmatmul.mubr.f32.gmra.mrb[0].mxu0 %v357
        %v1079 = vpop.f32.mrb[0].mxu0
        %v1080 = vadd.f32 0.0, %v1079
        %v1081 = vpop.f32.mrb[0].mxu0
        %v1082 = vadd.f32 0.0, %v1081
        %1083 = vdwg.mxu0
        %1084 = vmatprep.subr.mxu0 %v556
        %1085 = vmatpush1.msra.mxu0 %v555
        %1086 = vmatprep.subr.mxu0 %v562
        %1087 = vmatpush1.msra.mxu0 %v561
        %1088 = vmatprep.subr.mxu0 %v568
        %1089 = vmatpush1.msra.mxu0 %v567
        %1090 = vmatprep.subr.mxu0 %v574
        %1091 = vmatpush1.msra.mxu0 %v573
        %1092 = vmatprep.subr.mxu0 %v580
        %1093 = vmatpush1.msra.mxu0 %v579
        %1094 = vmatprep.subr.mxu0 %v586
        %1095 = vmatpush1.msra.mxu0 %v585
        %1096 = vmatprep.subr.mxu0 %v592
        %1097 = vmatpush1.msra.mxu0 %v591
        %1098 = vmatprep.subr.mxu0 %v598
        %1099 = vmatpush1.msra.mxu0 %v597
        %1100 = vmatprep.subr.mxu0 %v604
        %1101 = vmatpush1.msra.mxu0 %v603
        %1102 = vmatprep.subr.mxu0 %v610
        %1103 = vmatpush1.msra.mxu0 %v609
        %1104 = vmatprep.subr.mxu0 %v616
        %1105 = vmatpush1.msra.mxu0 %v615
        %1106 = vmatprep.subr.mxu0 %v622
        %1107 = vmatpush1.msra.mxu0 %v621
        %1108 = vmatprep.subr.mxu0 %v628
        %1109 = vmatpush1.msra.mxu0 %v627
        %1110 = vmatprep.subr.mxu0 %v634
        %1111 = vmatpush1.msra.mxu0 %v633
        %1112 = vmatprep.subr.mxu0 %v640
        %1113 = vmatpush1.msra.mxu0 %v639
        %1114 = vmatprep.subr.mxu0 %v646
        %1115 = vmatpush1.msra.mxu0 %v645
        %1116 = vmatprep.subr.mxu0 %v652
        %1117 = vmatpush1.msra.mxu0 %v651
        %1118 = vmatprep.subr.mxu0 %v658
        %1119 = vmatpush1.msra.mxu0 %v657
        %1120 = vmatprep.subr.mxu0 %v664
        %1121 = vmatpush1.msra.mxu0 %v663
        %1122 = vmatprep.subr.mxu0 %v670
        %1123 = vmatpush1.msra.mxu0 %v669
        %1124 = vmatprep.subr.mxu0 %v676
        %1125 = vmatpush1.msra.mxu0 %v675
        %1126 = vmatprep.subr.mxu0 %v682
        %1127 = vmatpush1.msra.mxu0 %v681
        %1128 = vmatprep.subr.mxu0 %v688
        %1129 = vmatpush1.msra.mxu0 %v687
        %1130 = vmatprep.subr.mxu0 %v694
        %1131 = vmatpush1.msra.mxu0 %v693
        %1132 = vmatprep.subr.mxu0 %v700
        %1133 = vmatpush1.msra.mxu0 %v699
        %1134 = vmatprep.subr.mxu0 %v706
        %1135 = vmatpush1.msra.mxu0 %v705
        %1136 = vmatprep.subr.mxu0 %v712
        %1137 = vmatpush1.msra.mxu0 %v711
        %1138 = vmatprep.subr.mxu0 %v718
        %1139 = vmatpush1.msra.mxu0 %v717
        %1140 = vmatprep.subr.mxu0 %v724
        %1141 = vmatpush1.msra.mxu0 %v723
        %1142 = vmatprep.subr.mxu0 %v730
        %1143 = vmatpush1.msra.mxu0 %v729
        %1144 = vmatprep.subr.mxu0 %v736
        %1145 = vmatpush1.msra.mxu0 %v735
        %1146 = vmatprep.subr.mxu0 %v742
        %1147 = vmatpush1.msra.mxu0 %v741
        %1148 = vmatprep.mubr.f32.mxu0 %v332
        %1149 = vmatmul.mubr.f32.gmra.mrb[0].mxu0 %v331
        %v1150 = vpop.f32.mrb[0].mxu0
        %v1151 = vadd.f32 %v1038, %v1150
        %v1152 = vpop.f32.mrb[0].mxu0
        %v1153 = vadd.f32 %v1040, %v1152
        %1154 = vmatprep.mubr.f32.mxu0 %v336
        %1155 = vmatmul.mubr.f32.gmra.mrb[0].mxu0 %v335
        %v1156 = vpop.f32.mrb[0].mxu0
        %v1157 = vadd.f32 %v1044, %v1156
        %v1158 = vpop.f32.mrb[0].mxu0
        %v1159 = vadd.f32 %v1046, %v1158
        %1160 = vmatprep.mubr.f32.mxu0 %v340
        %1161 = vmatmul.mubr.f32.gmra.mrb[0].mxu0 %v339
        %v1162 = vpop.f32.mrb[0].mxu0
        %v1163 = vadd.f32 %v1050, %v1162
        %v1164 = vpop.f32.mrb[0].mxu0
        %v1165 = vadd.f32 %v1052, %v1164
        %1166 = vmatprep.mubr.f32.mxu0 %v344
        %1167 = vmatmul.mubr.f32.gmra.mrb[0].mxu0 %v343
        %v1168 = vpop.f32.mrb[0].mxu0
        %v1169 = vadd.f32 %v1056, %v1168
        %v1170 = vpop.f32.mrb[0].mxu0
        %v1171 = vadd.f32 %v1058, %v1170
        %1172 = vmatprep.mubr.f32.mxu0 %v348
        %1173 = vmatmul.mubr.f32.gmra.mrb[0].mxu0 %v347
        %v1174 = vpop.f32.mrb[0].mxu0
        %v1175 = vadd.f32 %v1062, %v1174
        %v1176 = vpop.f32.mrb[0].mxu0
        %v1177 = vadd.f32 %v1064, %v1176
        %1178 = vmatprep.mubr.f32.mxu0 %v352
        %1179 = vmatmul.mubr.f32.gmra.mrb[0].mxu0 %v351
        %v1180 = vpop.f32.mrb[0].mxu0
        %v1181 = vadd.f32 %v1068, %v1180
        %v1182 = vpop.f32.mrb[0].mxu0
        %v1183 = vadd.f32 %v1070, %v1182
        %1184 = vmatprep.mubr.f32.mxu0 %v356
        %1185 = vmatmul.mubr.f32.gmra.mrb[0].mxu0 %v355
        %v1186 = vpop.f32.mrb[0].mxu0
        %v1187 = vadd.f32 %v1074, %v1186
        %v1188 = vpop.f32.mrb[0].mxu0
        %v1189 = vadd.f32 %v1076, %v1188
        %1190 = vmatprep.mubr.f32.mxu0 %v360
        %1191 = vmatmul.mubr.f32.gmra.mrb[0].mxu0 %v359
        %v1192 = vpop.f32.mrb[0].mxu0
        %v1193 = vadd.f32 %v1080, %v1192
        %v1194 = vpop.f32.mrb[0].mxu0
        %v1195 = vadd.f32 %v1082, %v1194
        %1196 = vdwg.mxu0
        %1197 = vmatprep.subr.mxu0 %v366
        %1198 = vmatpush1.msra.mxu0 %v365
        %1199 = vmatprep.subr.mxu0 %v372
        %1200 = vmatpush1.msra.mxu0 %v371
        %1201 = vmatprep.subr.mxu0 %v378
        %1202 = vmatpush1.msra.mxu0 %v377
        %1203 = vmatprep.subr.mxu0 %v384
        %1204 = vmatpush1.msra.mxu0 %v383
        %1205 = vmatprep.subr.mxu0 %v390
        %1206 = vmatpush1.msra.mxu0 %v389
        %1207 = vmatprep.subr.mxu0 %v396
        %1208 = vmatpush1.msra.mxu0 %v395
        %1209 = vmatprep.subr.mxu0 %v402
        %1210 = vmatpush1.msra.mxu0 %v401
        %1211 = vmatprep.subr.mxu0 %v408
        %1212 = vmatpush1.msra.mxu0 %v407
        %1213 = vmatprep.subr.mxu0 %v414
        %1214 = vmatpush1.msra.mxu0 %v413
        %1215 = vmatprep.subr.mxu0 %v420
        %1216 = vmatpush1.msra.mxu0 %v419
        %1217 = vmatprep.subr.mxu0 %v426
        %1218 = vmatpush1.msra.mxu0 %v425
        %1219 = vmatprep.subr.mxu0 %v432
        %1220 = vmatpush1.msra.mxu0 %v431
        %1221 = vmatprep.subr.mxu0 %v438
        %1222 = vmatpush1.msra.mxu0 %v437
        %1223 = vmatprep.subr.mxu0 %v444
        %1224 = vmatpush1.msra.mxu0 %v443
        %1225 = vmatprep.subr.mxu0 %v450
        %1226 = vmatpush1.msra.mxu0 %v449
        %1227 = vmatprep.subr.mxu0 %v456
        %1228 = vmatpush1.msra.mxu0 %v455
        %1229 = vmatprep.subr.mxu0 %v462
        %1230 = vmatpush1.msra.mxu0 %v461
        %1231 = vmatprep.subr.mxu0 %v468
        %1232 = vmatpush1.msra.mxu0 %v467
        %1233 = vmatprep.subr.mxu0 %v474
        %1234 = vmatpush1.msra.mxu0 %v473
        %1235 = vmatprep.subr.mxu0 %v480
        %1236 = vmatpush1.msra.mxu0 %v479
        %1237 = vmatprep.subr.mxu0 %v486
        %1238 = vmatpush1.msra.mxu0 %v485
        %1239 = vmatprep.subr.mxu0 %v492
        %1240 = vmatpush1.msra.mxu0 %v491
        %1241 = vmatprep.subr.mxu0 %v498
        %1242 = vmatpush1.msra.mxu0 %v497
        %1243 = vmatprep.subr.mxu0 %v504
        %1244 = vmatpush1.msra.mxu0 %v503
        %1245 = vmatprep.subr.mxu0 %v510
        %1246 = vmatpush1.msra.mxu0 %v509
        %1247 = vmatprep.subr.mxu0 %v516
        %1248 = vmatpush1.msra.mxu0 %v515
        %1249 = vmatprep.subr.mxu0 %v522
        %1250 = vmatpush1.msra.mxu0 %v521
        %1251 = vmatprep.subr.mxu0 %v528
        %1252 = vmatpush1.msra.mxu0 %v527
        %1253 = vmatprep.subr.mxu0 %v534
        %1254 = vmatpush1.msra.mxu0 %v533
        %1255 = vmatprep.subr.mxu0 %v540
        %1256 = vmatpush1.msra.mxu0 %v539
        %1257 = vmatprep.subr.mxu0 %v546
        %1258 = vmatpush1.msra.mxu0 %v545
        %1259 = vmatprep.subr.mxu0 %v552
        %1260 = vmatpush1.msra.mxu0 %v551
        %1261 = vmatprep.mubr.f32.mxu0 %v330
        %1262 = vmatmul.mubr.f32.gmra.mrb[0].mxu0 %v329
        %v1263 = vpop.f32.mrb[0].mxu0
        %v1264 = vadd.f32 0.0, %v1263
        %v1265 = vpop.f32.mrb[0].mxu0
        %v1266 = vadd.f32 0.0, %v1265
        %1267 = vmatprep.mubr.f32.mxu0 %v334
        %1268 = vmatmul.mubr.f32.gmra.mrb[0].mxu0 %v333
        %v1269 = vpop.f32.mrb[0].mxu0
        %v1270 = vadd.f32 0.0, %v1269
        %v1271 = vpop.f32.mrb[0].mxu0
        %v1272 = vadd.f32 0.0, %v1271
        %1273 = vmatprep.mubr.f32.mxu0 %v338
        %1274 = vmatmul.mubr.f32.gmra.mrb[0].mxu0 %v337
        %v1275 = vpop.f32.mrb[0].mxu0
        %v1276 = vadd.f32 0.0, %v1275
        %v1277 = vpop.f32.mrb[0].mxu0
        %v1278 = vadd.f32 0.0, %v1277
        %1279 = vmatprep.mubr.f32.mxu0 %v342
        %1280 = vmatmul.mubr.f32.gmra.mrb[0].mxu0 %v341
        %v1281 = vpop.f32.mrb[0].mxu0
        %v1282 = vadd.f32 0.0, %v1281
        %v1283 = vpop.f32.mrb[0].mxu0
        %v1284 = vadd.f32 0.0, %v1283
        %1285 = vmatprep.mubr.f32.mxu0 %v346
        %1286 = vmatmul.mubr.f32.gmra.mrb[0].mxu0 %v345
        %v1287 = vpop.f32.mrb[0].mxu0
        %v1288 = vadd.f32 0.0, %v1287
        %v1289 = vpop.f32.mrb[0].mxu0
        %v1290 = vadd.f32 0.0, %v1289
        %1291 = vmatprep.mubr.f32.mxu0 %v350
        %1292 = vmatmul.mubr.f32.gmra.mrb[0].mxu0 %v349
        %v1293 = vpop.f32.mrb[0].mxu0
        %v1294 = vadd.f32 0.0, %v1293
        %v1295 = vpop.f32.mrb[0].mxu0
        %v1296 = vadd.f32 0.0, %v1295
        %1297 = vmatprep.mubr.f32.mxu0 %v354
        %1298 = vmatmul.mubr.f32.gmra.mrb[0].mxu0 %v353
        %v1299 = vpop.f32.mrb[0].mxu0
        %v1300 = vadd.f32 0.0, %v1299
        %v1301 = vpop.f32.mrb[0].mxu0
        %v1302 = vadd.f32 0.0, %v1301
        %1303 = vmatprep.mubr.f32.mxu0 %v358
        %1304 = vmatmul.mubr.f32.gmra.mrb[0].mxu0 %v357
        %v1305 = vpop.f32.mrb[0].mxu0
        %v1306 = vadd.f32 0.0, %v1305
        %v1307 = vpop.f32.mrb[0].mxu0
        %v1308 = vadd.f32 0.0, %v1307
        %1309 = vdwg.mxu0
        %1310 = vmatprep.subr.mxu0 %v558
        %1311 = vmatpush1.msra.mxu0 %v557
        %1312 = vmatprep.subr.mxu0 %v564
        %1313 = vmatpush1.msra.mxu0 %v563
        %1314 = vmatprep.subr.mxu0 %v570
        %1315 = vmatpush1.msra.mxu0 %v569
        %1316 = vmatprep.subr.mxu0 %v576
        %1317 = vmatpush1.msra.mxu0 %v575
        %1318 = vmatprep.subr.mxu0 %v582
        %1319 = vmatpush1.msra.mxu0 %v581
        %1320 = vmatprep.subr.mxu0 %v588
        %1321 = vmatpush1.msra.mxu0 %v587
        %1322 = vmatprep.subr.mxu0 %v594
        %1323 = vmatpush1.msra.mxu0 %v593
        %1324 = vmatprep.subr.mxu0 %v600
        %1325 = vmatpush1.msra.mxu0 %v599
        %1326 = vmatprep.subr.mxu0 %v606
        %1327 = vmatpush1.msra.mxu0 %v605
        %1328 = vmatprep.subr.mxu0 %v612
        %1329 = vmatpush1.msra.mxu0 %v611
        %1330 = vmatprep.subr.mxu0 %v618
        %1331 = vmatpush1.msra.mxu0 %v617
        %1332 = vmatprep.subr.mxu0 %v624
        %1333 = vmatpush1.msra.mxu0 %v623
        %1334 = vmatprep.subr.mxu0 %v630
        %1335 = vmatpush1.msra.mxu0 %v629
        %1336 = vmatprep.subr.mxu0 %v636
        %1337 = vmatpush1.msra.mxu0 %v635
        %1338 = vmatprep.subr.mxu0 %v642
        %1339 = vmatpush1.msra.mxu0 %v641
        %1340 = vmatprep.subr.mxu0 %v648
        %1341 = vmatpush1.msra.mxu0 %v647
        %1342 = vmatprep.subr.mxu0 %v654
        %1343 = vmatpush1.msra.mxu0 %v653
        %1344 = vmatprep.subr.mxu0 %v660
        %1345 = vmatpush1.msra.mxu0 %v659
        %1346 = vmatprep.subr.mxu0 %v666
        %1347 = vmatpush1.msra.mxu0 %v665
        %1348 = vmatprep.subr.mxu0 %v672
        %1349 = vmatpush1.msra.mxu0 %v671
        %1350 = vmatprep.subr.mxu0 %v678
        %1351 = vmatpush1.msra.mxu0 %v677
        %1352 = vmatprep.subr.mxu0 %v684
        %1353 = vmatpush1.msra.mxu0 %v683
        %1354 = vmatprep.subr.mxu0 %v690
        %1355 = vmatpush1.msra.mxu0 %v689
        %1356 = vmatprep.subr.mxu0 %v696
        %1357 = vmatpush1.msra.mxu0 %v695
        %1358 = vmatprep.subr.mxu0 %v702
        %1359 = vmatpush1.msra.mxu0 %v701
        %1360 = vmatprep.subr.mxu0 %v708
        %1361 = vmatpush1.msra.mxu0 %v707
        %1362 = vmatprep.subr.mxu0 %v714
        %1363 = vmatpush1.msra.mxu0 %v713
        %1364 = vmatprep.subr.mxu0 %v720
        %1365 = vmatpush1.msra.mxu0 %v719
        %1366 = vmatprep.subr.mxu0 %v726
        %1367 = vmatpush1.msra.mxu0 %v725
        %1368 = vmatprep.subr.mxu0 %v732
        %1369 = vmatpush1.msra.mxu0 %v731
        %1370 = vmatprep.subr.mxu0 %v738
        %1371 = vmatpush1.msra.mxu0 %v737
        %1372 = vmatprep.subr.mxu0 %v744
        %1373 = vmatpush1.msra.mxu0 %v743
        %1374 = vmatprep.mubr.f32.mxu0 %v332
        %1375 = vmatmul.mubr.f32.gmra.mrb[0].mxu0 %v331
        %v1376 = vpop.f32.mrb[0].mxu0
        %v1377 = vadd.f32 %v1264, %v1376
        %v1378 = vpop.f32.mrb[0].mxu0
        %v1379 = vadd.f32 %v1266, %v1378
        %1380 = vmatprep.mubr.f32.mxu0 %v336
        %1381 = vmatmul.mubr.f32.gmra.mrb[0].mxu0 %v335
        %v1382 = vpop.f32.mrb[0].mxu0
        %v1383 = vadd.f32 %v1270, %v1382
        %v1384 = vpop.f32.mrb[0].mxu0
        %v1385 = vadd.f32 %v1272, %v1384
        %1386 = vmatprep.mubr.f32.mxu0 %v340
        %1387 = vmatmul.mubr.f32.gmra.mrb[0].mxu0 %v339
        %v1388 = vpop.f32.mrb[0].mxu0
        %v1389 = vadd.f32 %v1276, %v1388
        %v1390 = vpop.f32.mrb[0].mxu0
        %v1391 = vadd.f32 %v1278, %v1390
        %1392 = vmatprep.mubr.f32.mxu0 %v344
        %1393 = vmatmul.mubr.f32.gmra.mrb[0].mxu0 %v343
        %v1394 = vpop.f32.mrb[0].mxu0
        %v1395 = vadd.f32 %v1282, %v1394
        %v1396 = vpop.f32.mrb[0].mxu0
        %v1397 = vadd.f32 %v1284, %v1396
        %1398 = vmatprep.mubr.f32.mxu0 %v348
        %1399 = vmatmul.mubr.f32.gmra.mrb[0].mxu0 %v347
        %v1400 = vpop.f32.mrb[0].mxu0
        %v1401 = vadd.f32 %v1288, %v1400
        %v1402 = vpop.f32.mrb[0].mxu0
        %v1403 = vadd.f32 %v1290, %v1402
        %1404 = vmatprep.mubr.f32.mxu0 %v352
        %1405 = vmatmul.mubr.f32.gmra.mrb[0].mxu0 %v351
        %v1406 = vpop.f32.mrb[0].mxu0
        %v1407 = vadd.f32 %v1294, %v1406
        %v1408 = vpop.f32.mrb[0].mxu0
        %v1409 = vadd.f32 %v1296, %v1408
        %1410 = vmatprep.mubr.f32.mxu0 %v356
        %1411 = vmatmul.mubr.f32.gmra.mrb[0].mxu0 %v355
        %v1412 = vpop.f32.mrb[0].mxu0
        %v1413 = vadd.f32 %v1300, %v1412
        %v1414 = vpop.f32.mrb[0].mxu0
        %v1415 = vadd.f32 %v1302, %v1414
        %1416 = vmatprep.mubr.f32.mxu0 %v360
        %1417 = vmatmul.mubr.f32.gmra.mrb[0].mxu0 %v359
        %v1418 = vpop.f32.mrb[0].mxu0
        %v1419 = vadd.f32 %v1306, %v1418
        %v1420 = vpop.f32.mrb[0].mxu0
        %v1421 = vadd.f32 %v1308, %v1420
        %1422 = vdwg.mxu0
        %v1423 = vmul.f32 %v925, %v925
        %v1424 = vmul.f32 %v927, %v927
        %v1425 = vmul.f32 %v1151, %v1151
        %v1426 = vmul.f32 %v931, %v931
        %v1427 = vmul.f32 %v933, %v933
        %v1428 = vmul.f32 %v1157, %v1157
        %v1429 = vmul.f32 %v937, %v937
        %v1430 = vmul.f32 %v939, %v939
        %v1431 = vmul.f32 %v1163, %v1163
        %v1432 = vmul.f32 %v943, %v943
        %v1433 = vmul.f32 %v945, %v945
        %v1434 = vmul.f32 %v1169, %v1169
        %v1435 = vmul.f32 %v949, %v949
        %v1436 = vmul.f32 %v951, %v951
        %v1437 = vmul.f32 %v1175, %v1175
        %v1438 = vmul.f32 %v955, %v955
        %v1439 = vmul.f32 %v957, %v957
        %v1440 = vmul.f32 %v1181, %v1181
        %v1441 = vmul.f32 %v961, %v961
        %v1442 = vmul.f32 %v963, %v963
        %v1443 = vmul.f32 %v1187, %v1187
        %v1444 = vmul.f32 %v967, %v967
        %v1445 = vmul.f32 %v969, %v969
        %v1446 = vmul.f32 %v1193, %v1193
        %v1447 = vmul.f32 %v1153, %v1153
        %v1448 = vmul.f32 %v1377, %v1377
        %v1449 = vmul.f32 %v1379, %v1379
        %v1450 = vmul.f32 %v1159, %v1159
        %v1451 = vmul.f32 %v1383, %v1383
        %v1452 = vmul.f32 %v1385, %v1385
        %v1453 = vmul.f32 %v1165, %v1165
        %v1454 = vmul.f32 %v1389, %v1389
        %v1455 = vmul.f32 %v1391, %v1391
        %v1456 = vmul.f32 %v1171, %v1171
        %v1457 = vmul.f32 %v1395, %v1395
        %v1458 = vmul.f32 %v1397, %v1397
        %v1459 = vmul.f32 %v1177, %v1177
        %v1460 = vmul.f32 %v1401, %v1401
        %v1461 = vmul.f32 %v1403, %v1403
        %v1462 = vmul.f32 %v1183, %v1183
        %v1463 = vmul.f32 %v1407, %v1407
        %v1464 = vmul.f32 %v1409, %v1409
        %v1465 = vmul.f32 %v1189, %v1189
        %v1466 = vmul.f32 %v1413, %v1413
        %v1467 = vmul.f32 %v1415, %v1415
        %v1468 = vmul.f32 %v1195, %v1195
        %v1469 = vmul.f32 %v1419, %v1419
        %v1470 = vmul.f32 %v1421, %v1421
        %v1471 = vadd.f32 %v1423, %v1447
        %v1472 = vadd.f32 %v1424, %v1448
        %v1473 = vadd.f32 %v1425, %v1449
        %v1474 = vadd.f32 %v1426, %v1450
        %v1475 = vadd.f32 %v1427, %v1451
        %v1476 = vadd.f32 %v1428, %v1452
        %v1477 = vadd.f32 %v1429, %v1453
        %v1478 = vadd.f32 %v1430, %v1454
        %v1479 = vadd.f32 %v1431, %v1455
        %v1480 = vadd.f32 %v1432, %v1456
        %v1481 = vadd.f32 %v1433, %v1457
        %v1482 = vadd.f32 %v1434, %v1458
        %v1483 = vadd.f32 %v1435, %v1459
        %v1484 = vadd.f32 %v1436, %v1460
        %v1485 = vadd.f32 %v1437, %v1461
        %v1486 = vadd.f32 %v1438, %v1462
        %v1487 = vadd.f32 %v1439, %v1463
        %v1488 = vadd.f32 %v1440, %v1464
        %v1489 = vadd.f32 %v1441, %v1465
        %v1490 = vadd.f32 %v1442, %v1466
        %v1491 = vadd.f32 %v1443, %v1467
        %v1492 = vadd.f32 %v1444, %v1468
        %v1493 = vadd.f32 %v1445, %v1469
        %v1494 = vadd.f32 %v1446, %v1470
        %v1495 = vrsqrt.pop %v1471
        %v1496 = vmul.f32 %v1471, %v1495
        %vm1497 = vcmp.eq.f32.partialorder %v1471, inf
        %v1498 = vsel %vm1497, %v1471, %v1496
        %vm1499 = vcmp.eq.f32.partialorder %v1471, 0.0
        %v1500 = vand.u32 %v1471, 2147483648
        %v1501 = vsel %vm1499, %v1500, %v1498
        %v1502 = vrsqrt.pop %v1472
        %v1503 = vmul.f32 %v1472, %v1502
        %vm1504 = vcmp.eq.f32.partialorder %v1472, inf
        %v1505 = vsel %vm1504, %v1472, %v1503
        %vm1506 = vcmp.eq.f32.partialorder %v1472, 0.0
        %v1507 = vand.u32 %v1472, 2147483648
        %v1508 = vsel %vm1506, %v1507, %v1505
        %v1509 = vrsqrt.pop %v1473
        %v1510 = vmul.f32 %v1473, %v1509
        %vm1511 = vcmp.eq.f32.partialorder %v1473, inf
        %v1512 = vsel %vm1511, %v1473, %v1510
        %vm1513 = vcmp.eq.f32.partialorder %v1473, 0.0
        %v1514 = vand.u32 %v1473, 2147483648
        %v1515 = vsel %vm1513, %v1514, %v1512
        %v1516 = vrsqrt.pop %v1474
        %v1517 = vmul.f32 %v1474, %v1516
        %vm1518 = vcmp.eq.f32.partialorder %v1474, inf
        %v1519 = vsel %vm1518, %v1474, %v1517
        %vm1520 = vcmp.eq.f32.partialorder %v1474, 0.0
        %v1521 = vand.u32 %v1474, 2147483648
        %v1522 = vsel %vm1520, %v1521, %v1519
        %v1523 = vrsqrt.pop %v1475
        %v1524 = vmul.f32 %v1475, %v1523
        %vm1525 = vcmp.eq.f32.partialorder %v1475, inf
        %v1526 = vsel %vm1525, %v1475, %v1524
        %vm1527 = vcmp.eq.f32.partialorder %v1475, 0.0
        %v1528 = vand.u32 %v1475, 2147483648
        %v1529 = vsel %vm1527, %v1528, %v1526
        %v1530 = vrsqrt.pop %v1476
        %v1531 = vmul.f32 %v1476, %v1530
        %vm1532 = vcmp.eq.f32.partialorder %v1476, inf
        %v1533 = vsel %vm1532, %v1476, %v1531
        %vm1534 = vcmp.eq.f32.partialorder %v1476, 0.0
        %v1535 = vand.u32 %v1476, 2147483648
        %v1536 = vsel %vm1534, %v1535, %v1533
        %v1537 = vrsqrt.pop %v1477
        %v1538 = vmul.f32 %v1477, %v1537
        %vm1539 = vcmp.eq.f32.partialorder %v1477, inf
        %v1540 = vsel %vm1539, %v1477, %v1538
        %vm1541 = vcmp.eq.f32.partialorder %v1477, 0.0
        %v1542 = vand.u32 %v1477, 2147483648
        %v1543 = vsel %vm1541, %v1542, %v1540
        %v1544 = vrsqrt.pop %v1478
        %v1545 = vmul.f32 %v1478, %v1544
        %vm1546 = vcmp.eq.f32.partialorder %v1478, inf
        %v1547 = vsel %vm1546, %v1478, %v1545
        %vm1548 = vcmp.eq.f32.partialorder %v1478, 0.0
        %v1549 = vand.u32 %v1478, 2147483648
        %v1550 = vsel %vm1548, %v1549, %v1547
        %v1551 = vrsqrt.pop %v1479
        %v1552 = vmul.f32 %v1479, %v1551
        %vm1553 = vcmp.eq.f32.partialorder %v1479, inf
        %v1554 = vsel %vm1553, %v1479, %v1552
        %vm1555 = vcmp.eq.f32.partialorder %v1479, 0.0
        %v1556 = vand.u32 %v1479, 2147483648
        %v1557 = vsel %vm1555, %v1556, %v1554
        %v1558 = vrsqrt.pop %v1480
        %v1559 = vmul.f32 %v1480, %v1558
        %vm1560 = vcmp.eq.f32.partialorder %v1480, inf
        %v1561 = vsel %vm1560, %v1480, %v1559
        %vm1562 = vcmp.eq.f32.partialorder %v1480, 0.0
        %v1563 = vand.u32 %v1480, 2147483648
        %v1564 = vsel %vm1562, %v1563, %v1561
        %v1565 = vrsqrt.pop %v1481
        %v1566 = vmul.f32 %v1481, %v1565
        %vm1567 = vcmp.eq.f32.partialorder %v1481, inf
        %v1568 = vsel %vm1567, %v1481, %v1566
        %vm1569 = vcmp.eq.f32.partialorder %v1481, 0.0
        %v1570 = vand.u32 %v1481, 2147483648
        %v1571 = vsel %vm1569, %v1570, %v1568
        %v1572 = vrsqrt.pop %v1482
        %v1573 = vmul.f32 %v1482, %v1572
        %vm1574 = vcmp.eq.f32.partialorder %v1482, inf
        %v1575 = vsel %vm1574, %v1482, %v1573
        %vm1576 = vcmp.eq.f32.partialorder %v1482, 0.0
        %v1577 = vand.u32 %v1482, 2147483648
        %v1578 = vsel %vm1576, %v1577, %v1575
        %v1579 = vrsqrt.pop %v1483
        %v1580 = vmul.f32 %v1483, %v1579
        %vm1581 = vcmp.eq.f32.partialorder %v1483, inf
        %v1582 = vsel %vm1581, %v1483, %v1580
        %vm1583 = vcmp.eq.f32.partialorder %v1483, 0.0
        %v1584 = vand.u32 %v1483, 2147483648
        %v1585 = vsel %vm1583, %v1584, %v1582
        %v1586 = vrsqrt.pop %v1484
        %v1587 = vmul.f32 %v1484, %v1586
        %vm1588 = vcmp.eq.f32.partialorder %v1484, inf
        %v1589 = vsel %vm1588, %v1484, %v1587
        %vm1590 = vcmp.eq.f32.partialorder %v1484, 0.0
        %v1591 = vand.u32 %v1484, 2147483648
        %v1592 = vsel %vm1590, %v1591, %v1589
        %v1593 = vrsqrt.pop %v1485
        %v1594 = vmul.f32 %v1485, %v1593
        %vm1595 = vcmp.eq.f32.partialorder %v1485, inf
        %v1596 = vsel %vm1595, %v1485, %v1594
        %vm1597 = vcmp.eq.f32.partialorder %v1485, 0.0
        %v1598 = vand.u32 %v1485, 2147483648
        %v1599 = vsel %vm1597, %v1598, %v1596
        %v1600 = vrsqrt.pop %v1486
        %v1601 = vmul.f32 %v1486, %v1600
        %vm1602 = vcmp.eq.f32.partialorder %v1486, inf
        %v1603 = vsel %vm1602, %v1486, %v1601
        %vm1604 = vcmp.eq.f32.partialorder %v1486, 0.0
        %v1605 = vand.u32 %v1486, 2147483648
        %v1606 = vsel %vm1604, %v1605, %v1603
        %v1607 = vrsqrt.pop %v1487
        %v1608 = vmul.f32 %v1487, %v1607
        %vm1609 = vcmp.eq.f32.partialorder %v1487, inf
        %v1610 = vsel %vm1609, %v1487, %v1608
        %vm1611 = vcmp.eq.f32.partialorder %v1487, 0.0
        %v1612 = vand.u32 %v1487, 2147483648
        %v1613 = vsel %vm1611, %v1612, %v1610
        %v1614 = vrsqrt.pop %v1488
        %v1615 = vmul.f32 %v1488, %v1614
        %vm1616 = vcmp.eq.f32.partialorder %v1488, inf
        %v1617 = vsel %vm1616, %v1488, %v1615
        %vm1618 = vcmp.eq.f32.partialorder %v1488, 0.0
        %v1619 = vand.u32 %v1488, 2147483648
        %v1620 = vsel %vm1618, %v1619, %v1617
        %v1621 = vrsqrt.pop %v1489
        %v1622 = vmul.f32 %v1489, %v1621
        %vm1623 = vcmp.eq.f32.partialorder %v1489, inf
        %v1624 = vsel %vm1623, %v1489, %v1622
        %vm1625 = vcmp.eq.f32.partialorder %v1489, 0.0
        %v1626 = vand.u32 %v1489, 2147483648
        %v1627 = vsel %vm1625, %v1626, %v1624
        %v1628 = vrsqrt.pop %v1490
        %v1629 = vmul.f32 %v1490, %v1628
        %vm1630 = vcmp.eq.f32.partialorder %v1490, inf
        %v1631 = vsel %vm1630, %v1490, %v1629
        %vm1632 = vcmp.eq.f32.partialorder %v1490, 0.0
        %v1633 = vand.u32 %v1490, 2147483648
        %v1634 = vsel %vm1632, %v1633, %v1631
        %v1635 = vrsqrt.pop %v1491
        %v1636 = vmul.f32 %v1491, %v1635
        %vm1637 = vcmp.eq.f32.partialorder %v1491, inf
        %v1638 = vsel %vm1637, %v1491, %v1636
        %vm1639 = vcmp.eq.f32.partialorder %v1491, 0.0
        %v1640 = vand.u32 %v1491, 2147483648
        %v1641 = vsel %vm1639, %v1640, %v1638
        %v1642 = vrsqrt.pop %v1492
        %v1643 = vmul.f32 %v1492, %v1642
        %vm1644 = vcmp.eq.f32.partialorder %v1492, inf
        %v1645 = vsel %vm1644, %v1492, %v1643
        %vm1646 = vcmp.eq.f32.partialorder %v1492, 0.0
        %v1647 = vand.u32 %v1492, 2147483648
        %v1648 = vsel %vm1646, %v1647, %v1645
        %v1649 = vrsqrt.pop %v1493
        %v1650 = vmul.f32 %v1493, %v1649
        %vm1651 = vcmp.eq.f32.partialorder %v1493, inf
        %v1652 = vsel %vm1651, %v1493, %v1650
        %vm1653 = vcmp.eq.f32.partialorder %v1493, 0.0
        %v1654 = vand.u32 %v1493, 2147483648
        %v1655 = vsel %vm1653, %v1654, %v1652
        %v1656 = vrsqrt.pop %v1494
        %v1657 = vmul.f32 %v1494, %v1656
        %vm1658 = vcmp.eq.f32.partialorder %v1494, inf
        %v1659 = vsel %vm1658, %v1494, %v1657
        %vm1660 = vcmp.eq.f32.partialorder %v1494, 0.0
        %v1661 = vand.u32 %v1494, 2147483648
        %v1662 = vsel %vm1660, %v1661, %v1659
        %v1663 = vld [vmem:[#allocation8] sm:$0xff]
        %v1664 = vld [vmem:[#allocation8 + $0x8] sm:$0xff]
        %v1665 = vld [vmem:[#allocation8 + $0x10] sm:$0xff]
        %v1666 = vld [vmem:[#allocation8 + $0x18] sm:$0xff]
        %v1667 = vld [vmem:[#allocation8 + $0x20] sm:$0xff]
        %v1668 = vld [vmem:[#allocation8 + $0x28] sm:$0xff]
        %v1669 = vld [vmem:[#allocation8 + $0x30] sm:$0xff]
        %v1670 = vld [vmem:[#allocation8 + $0x38] sm:$0xff]
        %v1671 = vld [vmem:[#allocation8 + $0x40] sm:$0xff]
        %v1672 = vld [vmem:[#allocation8 + $0x48] sm:$0xff]
        %v1673 = vld [vmem:[#allocation8 + $0x50] sm:$0xff]
        %v1674 = vld [vmem:[#allocation8 + $0x58] sm:$0xff]
        %v1675 = vld [vmem:[#allocation8 + $0x60] sm:$0xff]
        %v1676 = vld [vmem:[#allocation8 + $0x68] sm:$0xff]
        %v1677 = vld [vmem:[#allocation8 + $0x70] sm:$0xff]
        %v1678 = vld [vmem:[#allocation8 + $0x78] sm:$0xff]
        %v1679 = vld [vmem:[#allocation8 + $0x80] sm:$0xff]
        %v1680 = vld [vmem:[#allocation8 + $0x88] sm:$0xff]
        %v1681 = vld [vmem:[#allocation8 + $0x90] sm:$0xff]
        %v1682 = vld [vmem:[#allocation8 + $0x98] sm:$0xff]
        %v1683 = vld [vmem:[#allocation8 + $0xa0] sm:$0xff]
        %v1684 = vld [vmem:[#allocation8 + $0xa8] sm:$0xff]
        %v1685 = vld [vmem:[#allocation8 + $0xb0] sm:$0xff]
        %v1686 = vld [vmem:[#allocation8 + $0xb8] sm:$0xff]
        %v1687 = vld [vmem:[#allocation8 + $0xc0] sm:$0xff]
        %v1688 = vld [vmem:[#allocation8 + $0xc8] sm:$0xff]
        %v1689 = vld [vmem:[#allocation8 + $0xd0] sm:$0xff]
        %v1690 = vld [vmem:[#allocation8 + $0xd8] sm:$0xff]
        %v1691 = vld [vmem:[#allocation8 + $0xe0] sm:$0xff]
        %v1692 = vld [vmem:[#allocation8 + $0xe8] sm:$0xff]
        %v1693 = vld [vmem:[#allocation8 + $0xf0] sm:$0xff]
        %v1694 = vld [vmem:[#allocation8 + $0xf8] sm:$0xff]
        %v1695 = vld [vmem:[#allocation8 + $0x100] sm:$0xff]
        %v1696 = vld [vmem:[#allocation8 + $0x108] sm:$0xff]
        %v1697 = vld [vmem:[#allocation8 + $0x110] sm:$0xff]
        %v1698 = vld [vmem:[#allocation8 + $0x118] sm:$0xff]
        %v1699 = vld [vmem:[#allocation8 + $0x120] sm:$0xff]
        %v1700 = vld [vmem:[#allocation8 + $0x128] sm:$0xff]
        %v1701 = vld [vmem:[#allocation8 + $0x130] sm:$0xff]
        %v1702 = vld [vmem:[#allocation8 + $0x138] sm:$0xff]
        %v1703 = vld [vmem:[#allocation8 + $0x140] sm:$0xff]
        %v1704 = vld [vmem:[#allocation8 + $0x148] sm:$0xff]
        %v1705 = vld [vmem:[#allocation8 + $0x150] sm:$0xff]
        %v1706 = vld [vmem:[#allocation8 + $0x158] sm:$0xff]
        %v1707 = vld [vmem:[#allocation8 + $0x160] sm:$0xff]
        %v1708 = vld [vmem:[#allocation8 + $0x168] sm:$0xff]
        %v1709 = vld [vmem:[#allocation8 + $0x170] sm:$0xff]
        %v1710 = vld [vmem:[#allocation8 + $0x178] sm:$0xff]
        %1711 = vmatprep.subr.mxu0 0.0
        %1712 = vmatpush1.msra.mxu0 %v1663
        %1713 = vmatprep.subr.mxu0 0.0
        %1714 = vmatpush1.msra.mxu0 %v1664
        %1715 = vmatprep.subr.mxu0 0.0
        %1716 = vmatpush1.msra.mxu0 %v1665
        %1717 = vmatprep.subr.mxu0 0.0
        %1718 = vmatpush1.msra.mxu0 %v1666
        %1719 = vmatprep.subr.mxu0 0.0
        %1720 = vmatpush1.msra.mxu0 %v1667
        %1721 = vmatprep.subr.mxu0 0.0
        %1722 = vmatpush1.msra.mxu0 %v1668
        %1723 = vmatprep.subr.mxu0 0.0
        %1724 = vmatpush1.msra.mxu0 %v1669
        %1725 = vmatprep.subr.mxu0 0.0
        %1726 = vmatpush1.msra.mxu0 %v1670
        %1727 = vmatprep.subr.mxu0 0.0
        %1728 = vmatpush1.msra.mxu0 %v1671
        %1729 = vmatprep.subr.mxu0 0.0
        %1730 = vmatpush1.msra.mxu0 %v1672
        %1731 = vmatprep.subr.mxu0 0.0
        %1732 = vmatpush1.msra.mxu0 %v1673
        %1733 = vmatprep.subr.mxu0 0.0
        %1734 = vmatpush1.msra.mxu0 %v1674
        %1735 = vmatprep.subr.mxu0 0.0
        %1736 = vmatpush1.msra.mxu0 %v1675
        %1737 = vmatprep.subr.mxu0 0.0
        %1738 = vmatpush1.msra.mxu0 %v1676
        %1739 = vmatprep.subr.mxu0 0.0
        %1740 = vmatpush1.msra.mxu0 %v1677
        %1741 = vmatprep.subr.mxu0 0.0
        %1742 = vmatpush1.msra.mxu0 %v1678
        %1743 = vmatprep.subr.mxu0 0.0
        %1744 = vmatpush1.msra.mxu0 %v1679
        %1745 = vmatprep.subr.mxu0 0.0
        %1746 = vmatpush1.msra.mxu0 %v1680
        %1747 = vmatprep.subr.mxu0 0.0
        %1748 = vmatpush1.msra.mxu0 %v1681
        %1749 = vmatprep.subr.mxu0 0.0
        %1750 = vmatpush1.msra.mxu0 %v1682
        %1751 = vmatprep.subr.mxu0 0.0
        %1752 = vmatpush1.msra.mxu0 %v1683
        %1753 = vmatprep.subr.mxu0 0.0
        %1754 = vmatpush1.msra.mxu0 %v1684
        %1755 = vmatprep.subr.mxu0 0.0
        %1756 = vmatpush1.msra.mxu0 %v1685
        %1757 = vmatprep.subr.mxu0 0.0
        %1758 = vmatpush1.msra.mxu0 %v1686
        %1759 = vmatprep.subr.mxu0 0.0
        %1760 = vmatpush1.msra.mxu0 %v1687
        %1761 = vmatprep.subr.mxu0 0.0
        %1762 = vmatpush1.msra.mxu0 %v1688
        %1763 = vmatprep.subr.mxu0 0.0
        %1764 = vmatpush1.msra.mxu0 %v1689
        %1765 = vmatprep.subr.mxu0 0.0
        %1766 = vmatpush1.msra.mxu0 %v1690
        %1767 = vmatprep.subr.mxu0 0.0
        %1768 = vmatpush1.msra.mxu0 %v1691
        %1769 = vmatprep.subr.mxu0 0.0
        %1770 = vmatpush1.msra.mxu0 %v1692
        %1771 = vmatprep.subr.mxu0 0.0
        %1772 = vmatpush1.msra.mxu0 %v1693
        %1773 = vmatprep.subr.mxu0 0.0
        %1774 = vmatpush1.msra.mxu0 %v1694
        %1775 = vmatprep.mubr.f32.mxu0 %v1508
        %1776 = vmatmul.mubr.f32.gmra.mrb[0].mxu0 %v1501
        %v1777 = vpop.f32.mrb[0].mxu0
        %v1778 = vadd.f32 0.0, %v1777
        %v1779 = vpop.f32.mrb[0].mxu0
        %1780 = vmatprep.mubr.f32.mxu0 %v1529
        %1781 = vmatmul.mubr.f32.gmra.mrb[0].mxu0 %v1522
        %v1782 = vpop.f32.mrb[0].mxu0
        %v1783 = vadd.f32 0.0, %v1782
        %v1784 = vpop.f32.mrb[0].mxu0
        %1785 = vmatprep.mubr.f32.mxu0 %v1550
        %1786 = vmatmul.mubr.f32.gmra.mrb[0].mxu0 %v1543
        %v1787 = vpop.f32.mrb[0].mxu0
        %v1788 = vadd.f32 0.0, %v1787
        %v1789 = vpop.f32.mrb[0].mxu0
        %1790 = vmatprep.mubr.f32.mxu0 %v1571
        %1791 = vmatmul.mubr.f32.gmra.mrb[0].mxu0 %v1564
        %v1792 = vpop.f32.mrb[0].mxu0
        %v1793 = vadd.f32 0.0, %v1792
        %v1794 = vpop.f32.mrb[0].mxu0
        %1795 = vmatprep.mubr.f32.mxu0 %v1592
        %1796 = vmatmul.mubr.f32.gmra.mrb[0].mxu0 %v1585
        %v1797 = vpop.f32.mrb[0].mxu0
        %v1798 = vadd.f32 0.0, %v1797
        %v1799 = vpop.f32.mrb[0].mxu0
        %1800 = vmatprep.mubr.f32.mxu0 %v1613
        %1801 = vmatmul.mubr.f32.gmra.mrb[0].mxu0 %v1606
        %v1802 = vpop.f32.mrb[0].mxu0
        %v1803 = vadd.f32 0.0, %v1802
        %v1804 = vpop.f32.mrb[0].mxu0
        %1805 = vmatprep.mubr.f32.mxu0 %v1634
        %1806 = vmatmul.mubr.f32.gmra.mrb[0].mxu0 %v1627
        %v1807 = vpop.f32.mrb[0].mxu0
        %v1808 = vadd.f32 0.0, %v1807
        %v1809 = vpop.f32.mrb[0].mxu0
        %1810 = vmatprep.mubr.f32.mxu0 %v1655
        %1811 = vmatmul.mubr.f32.gmra.mrb[0].mxu0 %v1648
        %v1812 = vpop.f32.mrb[0].mxu0
        %v1813 = vadd.f32 0.0, %v1812
        %v1814 = vpop.f32.mrb[0].mxu0
        %1815 = vdwg.mxu0
        %1816 = vmatprep.subr.mxu0 0.0
        %1817 = vmatpush1.msra.mxu0 %v1695
        %1818 = vmatprep.subr.mxu0 0.0
        %1819 = vmatpush1.msra.mxu0 %v1696
        %1820 = vmatprep.subr.mxu0 0.0
        %1821 = vmatpush1.msra.mxu0 %v1697
        %1822 = vmatprep.subr.mxu0 0.0
        %1823 = vmatpush1.msra.mxu0 %v1698
        %1824 = vmatprep.subr.mxu0 0.0
        %1825 = vmatpush1.msra.mxu0 %v1699
        %1826 = vmatprep.subr.mxu0 0.0
        %1827 = vmatpush1.msra.mxu0 %v1700
        %1828 = vmatprep.subr.mxu0 0.0
        %1829 = vmatpush1.msra.mxu0 %v1701
        %1830 = vmatprep.subr.mxu0 0.0
        %1831 = vmatpush1.msra.mxu0 %v1702
        %1832 = vmatprep.subr.mxu0 0.0
        %1833 = vmatpush1.msra.mxu0 %v1703
        %1834 = vmatprep.subr.mxu0 0.0
        %1835 = vmatpush1.msra.mxu0 %v1704
        %1836 = vmatprep.subr.mxu0 0.0
        %1837 = vmatpush1.msra.mxu0 %v1705
        %1838 = vmatprep.subr.mxu0 0.0
        %1839 = vmatpush1.msra.mxu0 %v1706
        %1840 = vmatprep.subr.mxu0 0.0
        %1841 = vmatpush1.msra.mxu0 %v1707
        %1842 = vmatprep.subr.mxu0 0.0
        %1843 = vmatpush1.msra.mxu0 %v1708
        %1844 = vmatprep.subr.mxu0 0.0
        %1845 = vmatpush1.msra.mxu0 %v1709
        %1846 = vmatprep.subr.mxu0 0.0
        %1847 = vmatpush1.msra.mxu0 %v1710
        %1848 = vmatprep.subr.mxu0 0.0
        %1849 = vmatpush1.msra.mxu0 0.0
        %1850 = vmatprep.subr.mxu0 0.0
        %1851 = vmatpush1.msra.mxu0 0.0
        %1852 = vmatprep.subr.mxu0 0.0
        %1853 = vmatpush1.msra.mxu0 0.0
        %1854 = vmatprep.subr.mxu0 0.0
        %1855 = vmatpush1.msra.mxu0 0.0
        %1856 = vmatprep.subr.mxu0 0.0
        %1857 = vmatpush1.msra.mxu0 0.0
        %1858 = vmatprep.subr.mxu0 0.0
        %1859 = vmatpush1.msra.mxu0 0.0
        %1860 = vmatprep.subr.mxu0 0.0
        %1861 = vmatpush1.msra.mxu0 0.0
        %1862 = vmatprep.subr.mxu0 0.0
        %1863 = vmatpush1.msra.mxu0 0.0
        %1864 = vmatprep.subr.mxu0 0.0
        %1865 = vmatpush1.msra.mxu0 0.0
        %1866 = vmatprep.subr.mxu0 0.0
        %1867 = vmatpush1.msra.mxu0 0.0
        %1868 = vmatprep.subr.mxu0 0.0
        %1869 = vmatpush1.msra.mxu0 0.0
        %1870 = vmatprep.subr.mxu0 0.0
        %1871 = vmatpush1.msra.mxu0 0.0
        %1872 = vmatprep.subr.mxu0 0.0
        %1873 = vmatpush1.msra.mxu0 0.0
        %1874 = vmatprep.subr.mxu0 0.0
        %1875 = vmatpush1.msra.mxu0 0.0
        %1876 = vmatprep.subr.mxu0 0.0
        %1877 = vmatpush1.msra.mxu0 0.0
        %1878 = vmatprep.subr.mxu0 0.0
        %1879 = vmatpush1.msra.mxu0 0.0
        %1880 = vmatprep.mubr.f32.mxu0 0.0
        %1881 = vmatmul.mubr.f32.gmra.mrb[0].mxu0 %v1515
        %v1882 = vpop.f32.mrb[0].mxu0
        %v1883 = vadd.f32 %v1778, %v1882
        %v1884 = vpop.f32.mrb[0].mxu0
        %1885 = vmatprep.mubr.f32.mxu0 0.0
        %1886 = vmatmul.mubr.f32.gmra.mrb[0].mxu0 %v1536
        %v1887 = vpop.f32.mrb[0].mxu0
        %v1888 = vadd.f32 %v1783, %v1887
        %v1889 = vpop.f32.mrb[0].mxu0
        %1890 = vmatprep.mubr.f32.mxu0 0.0
        %1891 = vmatmul.mubr.f32.gmra.mrb[0].mxu0 %v1557
        %v1892 = vpop.f32.mrb[0].mxu0
        %v1893 = vadd.f32 %v1788, %v1892
        %v1894 = vpop.f32.mrb[0].mxu0
        %1895 = vmatprep.mubr.f32.mxu0 0.0
        %1896 = vmatmul.mubr.f32.gmra.mrb[0].mxu0 %v1578
        %v1897 = vpop.f32.mrb[0].mxu0
        %v1898 = vadd.f32 %v1793, %v1897
        %v1899 = vpop.f32.mrb[0].mxu0
        %1900 = vmatprep.mubr.f32.mxu0 0.0
        %1901 = vmatmul.mubr.f32.gmra.mrb[0].mxu0 %v1599
        %v1902 = vpop.f32.mrb[0].mxu0
        %v1903 = vadd.f32 %v1798, %v1902
        %v1904 = vpop.f32.mrb[0].mxu0
        %1905 = vmatprep.mubr.f32.mxu0 0.0
        %1906 = vmatmul.mubr.f32.gmra.mrb[0].mxu0 %v1620
        %v1907 = vpop.f32.mrb[0].mxu0
        %v1908 = vadd.f32 %v1803, %v1907
        %v1909 = vpop.f32.mrb[0].mxu0
        %1910 = vmatprep.mubr.f32.mxu0 0.0
        %1911 = vmatmul.mubr.f32.gmra.mrb[0].mxu0 %v1641
        %v1912 = vpop.f32.mrb[0].mxu0
        %v1913 = vadd.f32 %v1808, %v1912
        %v1914 = vpop.f32.mrb[0].mxu0
        %1915 = vmatprep.mubr.f32.mxu0 0.0
        %1916 = vmatmul.mubr.f32.gmra.mrb[0].mxu0 %v1662
        %v1917 = vpop.f32.mrb[0].mxu0
        %v1918 = vadd.f32 %v1813, %v1917
        %v1919 = vpop.f32.mrb[0].mxu0
        %1920 = vdwg.mxu0
        %v1921 = vmax.f32 %v1883, 1e-05
        %v1922 = vmax.f32 %v1888, 1e-05
        %v1923 = vmax.f32 %v1893, 1e-05
        %v1924 = vmax.f32 %v1898, 1e-05
        %v1925 = vlog2.pop %v1921
        %v1926 = vmul.f32 %v1925, 0.6931472
        %v1927 = vlog2.pop %v1922
        %v1928 = vmul.f32 %v1927, 0.6931472
        %v1929 = vlog2.pop %v1923
        %v1930 = vmul.f32 %v1929, 0.6931472
        %v1931 = vlog2.pop %v1924
        %v1932 = vmul.f32 %v1931, 0.6931472
        %v1933 = vmul.f32 %v1926, 0.868589
        %v1934 = vmul.f32 %v1928, 0.868589
        %v1935 = vmul.f32 %v1930, 0.868589
        %v1936 = vmul.f32 %v1932, 0.868589
        %v1937 = vmax.f32 %v1903, 1e-05
        %v1938 = vmax.f32 %v1908, 1e-05
        %v1939 = vmax.f32 %v1913, 1e-05
        %v1940 = vmax.f32 %v1918, 1e-05
        %v1941 = vlog2.pop %v1937
        %v1942 = vmul.f32 %v1941, 0.6931472
        %v1943 = vlog2.pop %v1938
        %v1944 = vmul.f32 %v1943, 0.6931472
        %v1945 = vlog2.pop %v1939
        %v1946 = vmul.f32 %v1945, 0.6931472
        %v1947 = vlog2.pop %v1940
        %v1948 = vmul.f32 %v1947, 0.6931472
        %v1949 = vmul.f32 %v1942, 0.868589
        %v1950 = vmul.f32 %v1944, 0.868589
        %v1951 = vmul.f32 %v1946, 0.868589
        %v1952 = vmul.f32 %v1948, 0.868589
        %v1953 = vsub.f32 %v1933, %v1949
        %v1954 = vsub.f32 %v1934, %v1950
        %v1955 = vsub.f32 %v1935, %v1951
        %v1956 = vsub.f32 %v1936, %v1952
        %v1957 = vand.u32 2147483647, %v1953
        %v1958 = vand.u32 2147483647, %v1954
        %v1959 = vand.u32 2147483647, %v1955
        %v1960 = vand.u32 2147483647, %v1956
        %1961 = vst [vmem:[%s317] sm:$0xff] %v1957
        %1962 = vst [vmem:[%s317 + $0x8] sm:$0xff] %v1958
        %1963 = vst [vmem:[%s317 + $0x10] sm:$0xff] %v1959
        %1964 = vst [vmem:[%s317 + $0x18] sm:$0xff] %v1960
        %v1965 = vsub.f32 %v1883, %v1903
        %v1966 = vsub.f32 %v1888, %v1908
        %v1967 = vsub.f32 %v1893, %v1913
        %v1968 = vsub.f32 %v1898, %v1918
        %v1969 = vand.u32 2147483647, %v1965
        %v1970 = vand.u32 2147483647, %v1966
        %v1971 = vand.u32 2147483647, %v1967
        %v1972 = vand.u32 2147483647, %v1968
        %1973 = vst [vmem:[%s324] sm:$0xff] %v1969
        %1974 = vst [vmem:[%s324 + $0x8] sm:$0xff] %v1970
        %1975 = vst [vmem:[%s324 + $0x10] sm:$0xff] %v1971
        %1976 = vst [vmem:[%s324 + $0x18] sm:$0xff] %v1972
        %s1977 = sand.u32 %s132, 1
        %s1978 = scalar_lea.sflag [#allocation4], %s1977
        %s1979 = sand.u32 %s132, 1
        %s1980 = smul.addr %s1979, 32
        %s1981 = scalar_lea.vmem [#allocation10], %s1980
        %s1982 = sand.u32 %s158, 1
        %s1983 = scalar_lea.sflag [#allocation12], %s1982
        %s1984 = sand.u32 %s158, 1
        %s1985 = smul.addr %s1984, 32
        %s1986 = scalar_lea.vmem [#allocation11], %s1985
        // Predicated region
        $region53: #{tpu_custom_call.1} parent=35 // pred_check
          %p1987 = pneg %p142
        $region54: #{tpu_custom_call.1} parent=35 // pred_check_branch
          %1989 = sbr.rel (%p1987) target = $region56
        $region55: #{tpu_custom_call.1} parent=35 // pred_region
          %s1990 = smul.u32 4, %s30
          %s1992 = ssub.s32 512, 512
          %1993 = vsyncadd %s1978, %s1992
          %s1994 = smul.addr %s1990, 128
          %s1995 = scalar_lea.hbm %s4, %s1994
          %s1996 = sshll.u32 %s1981, 4
          %s1997 = int_to_ptr.vmem [resolvable:$true] %s1996
          %2002 = dma.vmem_to_hbm [thread:$0]  %s1997, 512, %s1995, %s1978, 128, 128, 8
        $region56: #{tpu_custom_call.1} parent=35 // pred_fallthru
          _
        // Predicated region
        $region57: #{tpu_custom_call.1} parent=35 // pred_check
          %p2003 = pneg %p168
        $region58: #{tpu_custom_call.1} parent=35 // pred_check_branch
          %2005 = sbr.rel (%p2003) target = $region60
        $region59: #{tpu_custom_call.1} parent=35 // pred_region
          %s2006 = smul.u32 4, %s30
          %s2008 = ssub.s32 512, 512
          %2009 = vsyncadd %s1983, %s2008
          %s2010 = smul.addr %s2006, 128
          %s2011 = scalar_lea.hbm %s5, %s2010
          %s2012 = sshll.u32 %s1986, 4
          %s2013 = int_to_ptr.vmem [resolvable:$true] %s2012
          %2018 = dma.vmem_to_hbm [thread:$0]  %s2013, 512, %s2011, %s1983, 128, 128, 8
        $region60: #{tpu_custom_call.1} parent=35 // pred_fallthru
          _
      $region36: #{tpu_custom_call.1} parent=5 // pred_fallthru
        _
      %p2019 = scmp.le.s32.totalorder 2, %s25
      // Predicated region
      $region61: #{tpu_custom_call.1} parent=5 // pred_check
        %p2020 = pneg %p2019
      $region62: #{tpu_custom_call.1} parent=5 // pred_check_branch
        %2022 = sbr.rel (%p2020) target = $region64
      $region63: #{tpu_custom_call.1} parent=5 // pred_region
        %s2023 = ssub.s32 %s25, 2
        // Predicated region
        $region65: #{tpu_custom_call.1} parent=63 // pred_check
          %p2024 = pneg %p148
        $region66: #{tpu_custom_call.1} parent=63 // pred_check_branch
          %2026 = sbr.rel (%p2024) target = $region68
        $region67: #{tpu_custom_call.1} parent=63 // pred_region
          %s2027 = sand.u32 %s133, 1
          %s2028 = scalar_lea.sflag [#allocation4], %s2027
          %s2029 = sand.u32 %s133, 1
          %s2030 = smul.addr %s2029, 32
          %s2031 = scalar_lea.vmem [#allocation10], %s2030
          %2032 = dma.done %s2028, 512
        $region68: #{tpu_custom_call.1} parent=63 // pred_fallthru
          _
        // Predicated region
        $region69: #{tpu_custom_call.1} parent=63 // pred_check
          %p2033 = pneg %p174
        $region70: #{tpu_custom_call.1} parent=63 // pred_check_branch
          %2035 = sbr.rel (%p2033) target = $region72
        $region71: #{tpu_custom_call.1} parent=63 // pred_region
          %s2036 = sand.u32 %s159, 1
          %s2037 = scalar_lea.sflag [#allocation12], %s2036
          %s2038 = sand.u32 %s159, 1
          %s2039 = smul.addr %s2038, 32
          %s2040 = scalar_lea.vmem [#allocation11], %s2039
          %2041 = dma.done %s2037, 512
        $region72: #{tpu_custom_call.1} parent=63 // pred_fallthru
          _
      $region64: #{tpu_custom_call.1} parent=5 // pred_fallthru
        _
    $region6: #{tpu_custom_call.1} parent=1 // loop_footer
      %s29 = sadd.s32 1, %s25
    $region7: #{tpu_custom_call.1} parent=1 // loop_footer_branch
      %24 = sbr.rel target = $region3
    $region8: #{tpu_custom_call.1} parent=1 // loop_exit
      _
    %2042 = vsyncpa [#allocation3], 1
    %s2043 = scalar_lea.sflag [#allocation3], 1
    %2044 = vsyncpa %s2043, 1
    %2045 = vsyncpa [#allocation6], 1
    %s2046 = scalar_lea.sflag [#allocation6], 1
    %2047 = vsyncpa %s2046, 1
    %2048 = vsyncpa [#allocation9], 1
    %2049 = vsyncpa [#allocation4], 1
    %s2050 = scalar_lea.sflag [#allocation4], 1
    %2051 = vsyncpa %s2050, 1
    %2052 = vsyncpa [#allocation12], 1
    %s2053 = scalar_lea.sflag [#allocation12], 1
    %2054 = vsyncpa %s2053, 1

</llo_original>
